<compile_context>
chip_gen: v5e
topology: v5e:2x2
jax: 0.10.0
libtpu: 0.0.40
codegen_flags: <defaults>
</compile_context>

<pallas_src>
import jax
import jax.numpy as jnp
from jax.experimental import pallas as pl
from jax.experimental.pallas import tpu as pltpu

POS_DIM = 3
INPUT_SEQUENCE_LENGTH = 6
STEPS = 4
HIDDEN = 32
TILE_N = 128                                   # particles per tile (lane axis)
HIST_ROWS = INPUT_SEQUENCE_LENGTH * POS_DIM    # 18 rows of position history
D_IN = HIST_ROWS + POS_DIM                     # flattened history + step_context


def _make_rollout_kernel(steps):
    def kernel(hist_ref, gt_ref, ptype_ref, valid_ref,
               w1t_ref, b1_ref, w2t_ref, b2_ref, w3t_ref, b3_ref,
               pred_ref, loss_ref):
        tile = hist_ref.shape[1]

        cur = hist_ref[...]                      # [HIST_ROWS, tile]
        gt = gt_ref[...]                         # [steps*3, tile]

        # Invariants hoisted out of the autoregressive loop.
        kin = jnp.broadcast_to(ptype_ref[...] == 3, (POS_DIM, tile))
        w1t = w1t_ref[...]                       # [H, 18]
        w2t = w2t_ref[...]                       # [H, H]
        w3t = w3t_ref[...]                       # [3, H]
        b1 = jnp.broadcast_to(b1_ref[...], (HIDDEN, tile))
        b2 = jnp.broadcast_to(b2_ref[...], (HIDDEN, tile))
        b3 = jnp.broadcast_to(b3_ref[...], (POS_DIM, tile))

        preds = []
        for step in range(steps):                # static unrolled rollout
            h = jnp.dot(w1t, cur, preferred_element_type=jnp.float32) + b1
            h = jnp.maximum(h, 0.0)
            h = jnp.dot(w2t, h, preferred_element_type=jnp.float32) + b2
            h = jnp.maximum(h, 0.0)
            accel = jnp.dot(w3t, h, preferred_element_type=jnp.float32) + b3

            last = cur[HIST_ROWS - POS_DIM:, :]
            prev = cur[HIST_ROWS - 2 * POS_DIM:HIST_ROWS - POS_DIM, :]
            next_pos = last + (last - prev) + accel           # semi-implicit Euler
            gt_step = gt[step * POS_DIM:(step + 1) * POS_DIM, :]
            next_pos = jnp.where(kin, gt_step, next_pos)      # kinematic override
            preds.append(next_pos)
            # shift the history window (kept in vregs, never leaves the kernel)
            cur = jnp.concatenate([cur[POS_DIM:, :], next_pos], axis=0)

        pred_all = jnp.concatenate(preds, axis=0)             # [steps*3, tile]
        pred_ref[...] = pred_all                              # lane-dense store

        d = (pred_all - gt) * valid_ref[...]                  # mask padded lanes
        tile_loss = jnp.sum(d * d, axis=(0, 1), keepdims=True)
        loss_ref[...] = tile_loss.reshape(1, 1, 1)

    return kernel


def simulator_rollout(position, particle_type, ct0, ct1, ct2, params,
                      steps=STEPS, tile_n=TILE_N):
    """JAX / Pallas equivalent of SimulatorRolloutNet.forward.

    position      : [N, T_total, 3] float32
    particle_type : [N] int32
    ct0/ct1/ct2   : scalar learnable parameters (pre-rescale)
    Returns (loss, predictions [steps, N, 3], ground_truth [steps, N, 3]).
    """
    n = position.shape[0]
    num_tiles = pl.cdiv(n, tile_n)
    n_pad = num_tiles * tile_n
    pad = n_pad - n

    w1, b1, w2, b2, w3, b3 = params

    # step_context row 0 (only row 0 of the expanded context is used downstream)
    step_context = jnp.stack([ct0 * 2900.0 + 100.0,
                              ct1 * 195.0 + 5.0,
                              ct2 * 0.45]).astype(jnp.float32)            # [3]

    # Context is constant across particles and steps -> fold its first-layer
    # contribution into the bias instead of shipping an [N, 3] array to HBM.
    w1_hist = w1[:HIST_ROWS]                                              # [18, H]
    w1_ctx = w1[HIST_ROWS:]                                               # [3, H]
    b1_eff = b1.reshape(-1) + step_context @ w1_ctx                       # [H]

    w1t = jnp.transpose(w1_hist)                                          # [H, 18]
    w2t = jnp.transpose(w2)                                               # [H, H]
    w3t = jnp.transpose(w3)                                               # [3, H]
    b1c = b1_eff.reshape(HIDDEN, 1)
    b2c = b2.reshape(HIDDEN, 1)
    b3c = b3.reshape(POS_DIM, 1)

    hist = position[:, :INPUT_SEQUENCE_LENGTH]                            # [N, seq, 3]
    gt = position[:, INPUT_SEQUENCE_LENGTH:INPUT_SEQUENCE_LENGTH + steps] # [N, steps, 3]

    # Particles-on-lanes layout: row = (frame, xyz), col = particle.
    hist_t = jnp.transpose(hist, (1, 2, 0)).reshape(HIST_ROWS, n)
    gt_t = jnp.transpose(gt, (1, 2, 0)).reshape(steps * POS_DIM, n)

    hist_t = jnp.pad(hist_t, ((0, 0), (0, pad)))
    gt_t = jnp.pad(gt_t, ((0, 0), (0, pad)))
    ptype_row = jnp.pad(particle_type.astype(jnp.int32), (0, pad)).reshape(1, n_pad)
    valid_row = jnp.pad(jnp.ones((n,), jnp.float32), (0, pad)).reshape(1, n_pad)

    row_block = lambda r: pl.BlockSpec((r, tile_n), lambda i: (0, i))
    full_block = lambda shape: pl.BlockSpec(shape, lambda i: (0, 0))

    pred_t, loss_parts = pl.pallas_call(
        _make_rollout_kernel(steps),
        out_shape=(
            jax.ShapeDtypeStruct((steps * POS_DIM, n_pad), jnp.float32),
            jax.ShapeDtypeStruct((num_tiles, 1, 1), jnp.float32),
        ),
        grid_spec=pltpu.PrefetchScalarGridSpec(
            num_scalar_prefetch=0,
            grid=(num_tiles,),
            in_specs=[
                row_block(HIST_ROWS),              # position history (6 frames)
                row_block(steps * POS_DIM),        # ground truth, all steps
                row_block(1),                      # particle type
                row_block(1),                      # valid-lane mask
                full_block((HIDDEN, HIST_ROWS)),   # w1^T (history part)
                full_block((HIDDEN, 1)),           # b1 (+ folded context)
                full_block((HIDDEN, HIDDEN)),      # w2^T
                full_block((HIDDEN, 1)),           # b2
                full_block((POS_DIM, HIDDEN)),     # w3^T
                full_block((POS_DIM, 1)),          # b3
            ],
            out_specs=[
                row_block(steps * POS_DIM),                    # predictions
                pl.BlockSpec((1, 1, 1), lambda i: (i, 0, 0)),  # per-tile loss partial
            ],
        ),
        compiler_params=pltpu.CompilerParams(
            dimension_semantics=("parallel",)),
    )(hist_t, gt_t, ptype_row, valid_row, w1t, b1c, w2t, b2c, w3t, b3c)

    predictions = jnp.transpose(
        pred_t.reshape(steps, POS_DIM, n_pad)[:, :, :n], (0, 2, 1))       # [steps, N, 3]
    ground_truth = jnp.transpose(gt, (1, 0, 2))                           # [steps, N, 3]
    loss = jnp.sum(loss_parts)
    return loss, predictions, ground_truth


def simulator_rollout_reference(position, particle_type, ct0, ct1, ct2, params,
                                steps=STEPS):
    """Pure-JAX reference matching the PyTorch module (for correctness check)."""
    n = position.shape[0]
    w1, b1, w2, b2, w3, b3 = params
    step_context = jnp.stack([ct0 * 2900.0 + 100.0,
                              ct1 * 195.0 + 5.0,
                              ct2 * 0.45]).astype(jnp.float32)
    ctx_rows = jnp.broadcast_to(step_context[None, :], (n, POS_DIM))
    current = position[:, :INPUT_SEQUENCE_LENGTH]
    gt = position[:, INPUT_SEQUENCE_LENGTH:INPUT_SEQUENCE_LENGTH + steps]
    kin = (particle_type == 3)[:, None]
    preds = []
    for step in range(steps):
        feat = jnp.concatenate([current.reshape(n, HIST_ROWS), ctx_rows], axis=1)
        h = jnp.maximum(feat @ w1 + b1, 0.0)
        h = jnp.maximum(h @ w2 + b2, 0.0)
        accel = h @ w3 + b3
        next_pos = current[:, -1] + (current[:, -1] - current[:, -2]) + accel
        next_pos = jnp.where(kin, gt[:, step], next_pos)
        preds.append(next_pos)
        current = jnp.concatenate([current[:, 1:], next_pos[:, None, :]], axis=1)
    preds = jnp.stack(preds)
    gt_perm = jnp.transpose(gt, (1, 0, 2))
    loss = jnp.sum((preds - gt_perm) ** 2)
    return loss, preds, gt_perm


def init_simulator_params(key):
    k1, k2, k3 = jax.random.split(key, 3)
    scale = 0.05
    w1 = scale * jax.random.normal(k1, (D_IN, HIDDEN), jnp.float32)
    # The real simulator normalizes global_context; damp the context rows of the
    # stand-in MLP so the raw rescaled ct values (~1550) stay well conditioned.
    w1 = w1.at[HIST_ROWS:].multiply(1e-3)
    b1 = jnp.zeros((1, HIDDEN), jnp.float32)
    w2 = scale * jax.random.normal(k2, (HIDDEN, HIDDEN), jnp.float32)
    b2 = jnp.zeros((1, HIDDEN), jnp.float32)
    w3 = scale * jax.random.normal(k3, (HIDDEN, POS_DIM), jnp.float32)
    b3 = jnp.zeros((1, POS_DIM), jnp.float32)
    return (w1, b1, w2, b2, w3, b3)


if __name__ == "__main__":
    key = jax.random.PRNGKey(0)
    k_pos, k_type, k_params = jax.random.split(key, 3)

    N = 256                                      # two 128-lane tiles (one per TC on v7x)
    T_TOTAL = INPUT_SEQUENCE_LENGTH + STEPS + 2  # history + rollout + slack

    position = 0.1 * jax.random.normal(k_pos, (N, T_TOTAL, POS_DIM), jnp.float32)
    # mix of fluid (0) and kinematic gripper (3) particles
    particle_type = jnp.where(
        jax.random.uniform(k_type, (N,)) < 0.25, 3, 0).astype(jnp.int32)

    params = init_simulator_params(k_params)

    ct0 = jnp.float32(0.5)
    ct1 = jnp.float32(0.3)
    ct2 = jnp.float32(0.7)

    rollout_fn = jax.jit(
        lambda pos, pt: simulator_rollout(pos, pt, ct0, ct1, ct2, params, STEPS))
    loss, preds, gt = rollout_fn(position, particle_type)
    jax.block_until_ready((loss, preds, gt))

    assert preds.shape == (STEPS, N, POS_DIM)
    assert gt.shape == (STEPS, N, POS_DIM)
    assert loss.shape == ()

    ref_loss, ref_preds, ref_gt = jax.jit(
        lambda pos, pt: simulator_rollout_reference(
            pos, pt, ct0, ct1, ct2, params, STEPS))(position, particle_type)
    assert jnp.allclose(gt, ref_gt)
    assert jnp.allclose(preds, ref_preds, rtol=1e-2, atol=1e-2)
    assert jnp.allclose(loss, ref_loss, rtol=1e-2, atol=1e-2)

    print("KERNEL_OK")
</pallas_src>

<mosaic_0001>
module attributes {stable_mosaic.version = 11 : i64} {
  func.func @kernel(%arg0: i32, %arg1: memref<18x128xf32, #tpu.memory_space<vmem>>, %arg2: memref<12x128xf32, #tpu.memory_space<vmem>>, %arg3: memref<1x128xi32, #tpu.memory_space<vmem>>, %arg4: memref<1x128xf32, #tpu.memory_space<vmem>>, %arg5: memref<32x18xf32, #tpu.memory_space<vmem>>, %arg6: memref<32x1xf32, #tpu.memory_space<vmem>>, %arg7: memref<32x32xf32, #tpu.memory_space<vmem>>, %arg8: memref<32x1xf32, #tpu.memory_space<vmem>>, %arg9: memref<3x32xf32, #tpu.memory_space<vmem>>, %arg10: memref<3x1xf32, #tpu.memory_space<vmem>>, %arg11: memref<12x128xf32, #tpu.memory_space<vmem>>, %arg12: memref<1x1x1xf32, #tpu.memory_space<vmem>>) attributes {dimension_semantics = [#tpu.dimension_semantics<parallel>], iteration_bounds = array<i64: 2>, scalar_prefetch = 0 : i64, scratch_operands = 0 : i64, tpu.core_type = #tpu.core_type<tc>, window_params = [{transform_indices = @transform_0, window_bounds = array<i64: 18, 128>}, {transform_indices = @transform_1, window_bounds = array<i64: 12, 128>}, {transform_indices = @transform_2, window_bounds = array<i64: 1, 128>}, {transform_indices = @transform_3, window_bounds = array<i64: 1, 128>}, {pipeline_mode = #tpu.pipeline_mode<synchronous>, transform_indices = @transform_4, window_bounds = array<i64: 32, 18>}, {pipeline_mode = #tpu.pipeline_mode<synchronous>, transform_indices = @transform_5, window_bounds = array<i64: 32, 1>}, {pipeline_mode = #tpu.pipeline_mode<synchronous>, transform_indices = @transform_6, window_bounds = array<i64: 32, 32>}, {pipeline_mode = #tpu.pipeline_mode<synchronous>, transform_indices = @transform_7, window_bounds = array<i64: 32, 1>}, {pipeline_mode = #tpu.pipeline_mode<synchronous>, transform_indices = @transform_8, window_bounds = array<i64: 3, 32>}, {pipeline_mode = #tpu.pipeline_mode<synchronous>, transform_indices = @transform_9, window_bounds = array<i64: 3, 1>}, {transform_indices = @transform_10, window_bounds = array<i64: 12, 128>}, {transform_indices = @transform_11, window_bounds = array<i64: 1, 1, 1>}]} {
    %c0 = arith.constant 0 : index
    %c0_0 = arith.constant 0 : index
    %0 = vector.load %arg1[%c0, %c0_0] : memref<18x128xf32, #tpu.memory_space<vmem>>, vector<18x128xf32>
    %c0_1 = arith.constant 0 : index
    %c0_2 = arith.constant 0 : index
    %1 = vector.load %arg2[%c0_1, %c0_2] : memref<12x128xf32, #tpu.memory_space<vmem>>, vector<12x128xf32>
    %c0_3 = arith.constant 0 : index
    %c0_4 = arith.constant 0 : index
    %2 = vector.load %arg3[%c0_3, %c0_4] : memref<1x128xi32, #tpu.memory_space<vmem>>, vector<1x128xi32>
    %c3_i32 = arith.constant 3 : i32
    %3 = vector.broadcast %c3_i32 : i32 to vector<1x128xi32>
    %4 = arith.cmpi eq, %2, %3 : vector<1x128xi32>
    %5 = vector.shape_cast %4 : vector<1x128xi1> to vector<1x128xi1>
    %6 = vector.broadcast %5 : vector<1x128xi1> to vector<3x128xi1>
    %c0_5 = arith.constant 0 : index
    %c0_6 = arith.constant 0 : index
    %7 = vector.load %arg5[%c0_5, %c0_6] : memref<32x18xf32, #tpu.memory_space<vmem>>, vector<32x18xf32>
    %c0_7 = arith.constant 0 : index
    %c0_8 = arith.constant 0 : index
    %8 = vector.load %arg7[%c0_7, %c0_8] : memref<32x32xf32, #tpu.memory_space<vmem>>, vector<32x32xf32>
    %c0_9 = arith.constant 0 : index
    %c0_10 = arith.constant 0 : index
    %9 = vector.load %arg9[%c0_9, %c0_10] : memref<3x32xf32, #tpu.memory_space<vmem>>, vector<3x32xf32>
    %c0_11 = arith.constant 0 : index
    %c0_12 = arith.constant 0 : index
    %10 = vector.load %arg6[%c0_11, %c0_12] : memref<32x1xf32, #tpu.memory_space<vmem>>, vector<32x1xf32>
    %11 = vector.shape_cast %10 : vector<32x1xf32> to vector<32x1xf32>
    %12 = vector.broadcast %11 : vector<32x1xf32> to vector<32x128xf32>
    %c0_13 = arith.constant 0 : index
    %c0_14 = arith.constant 0 : index
    %13 = vector.load %arg8[%c0_13, %c0_14] : memref<32x1xf32, #tpu.memory_space<vmem>>, vector<32x1xf32>
    %14 = vector.shape_cast %13 : vector<32x1xf32> to vector<32x1xf32>
    %15 = vector.broadcast %14 : vector<32x1xf32> to vector<32x128xf32>
    %c0_15 = arith.constant 0 : index
    %c0_16 = arith.constant 0 : index
    %16 = vector.load %arg10[%c0_15, %c0_16] : memref<3x1xf32, #tpu.memory_space<vmem>>, vector<3x1xf32>
    %17 = vector.shape_cast %16 : vector<3x1xf32> to vector<3x1xf32>
    %18 = vector.broadcast %17 : vector<3x1xf32> to vector<3x128xf32>
    %cst = arith.constant dense<0.000000e+00> : vector<32x128xf32>
    %19 = tpu.matmul %7, %0, %cst {dimension_numbers = #tpu.dot_dimension_numbers<[1], [0], [0], [1], [0, 0, 1, 1], [], []>} : vector<32x18xf32>, vector<18x128xf32>, vector<32x128xf32> -> vector<32x128xf32>
    %20 = arith.addf %19, %12 : vector<32x128xf32>
    %cst_17 = arith.constant 0.000000e+00 : f32
    %21 = vector.broadcast %cst_17 : f32 to vector<32x128xf32>
    %22 = arith.maximumf %20, %21 : vector<32x128xf32>
    %cst_18 = arith.constant dense<0.000000e+00> : vector<32x128xf32>
    %23 = tpu.matmul %8, %22, %cst_18 {dimension_numbers = #tpu.dot_dimension_numbers<[1], [0], [0], [1], [0, 0, 1, 1], [], []>} : vector<32x32xf32>, vector<32x128xf32>, vector<32x128xf32> -> vector<32x128xf32>
    %24 = arith.addf %23, %15 : vector<32x128xf32>
    %cst_19 = arith.constant 0.000000e+00 : f32
    %25 = vector.broadcast %cst_19 : f32 to vector<32x128xf32>
    %26 = arith.maximumf %24, %25 : vector<32x128xf32>
    %cst_20 = arith.constant dense<0.000000e+00> : vector<3x128xf32>
    %27 = tpu.matmul %9, %26, %cst_20 {dimension_numbers = #tpu.dot_dimension_numbers<[1], [0], [0], [1], [0, 0, 1, 1], [], []>} : vector<3x32xf32>, vector<32x128xf32>, vector<3x128xf32> -> vector<3x128xf32>
    %28 = arith.addf %27, %18 : vector<3x128xf32>
    %29 = vector.extract_strided_slice %0 {offsets = [15, 0], sizes = [3, 128], strides = [1, 1]} : vector<18x128xf32> to vector<3x128xf32>
    %30 = vector.extract_strided_slice %0 {offsets = [12, 0], sizes = [3, 128], strides = [1, 1]} : vector<18x128xf32> to vector<3x128xf32>
    %31 = arith.subf %29, %30 : vector<3x128xf32>
    %32 = arith.addf %29, %31 : vector<3x128xf32>
    %33 = arith.addf %32, %28 : vector<3x128xf32>
    %34 = vector.extract_strided_slice %1 {offsets = [0, 0], sizes = [3, 128], strides = [1, 1]} : vector<12x128xf32> to vector<3x128xf32>
    %35 = arith.select %6, %34, %33 : vector<3x128xi1>, vector<3x128xf32>
    %36 = vector.extract_strided_slice %0 {offsets = [3, 0], sizes = [15, 128], strides = [1, 1]} : vector<18x128xf32> to vector<15x128xf32>
    %37 = tpu.concatenate %36, %35 in 0 : vector<15x128xf32>, vector<3x128xf32> -> vector<18x128xf32>
    %cst_21 = arith.constant dense<0.000000e+00> : vector<32x128xf32>
    %38 = tpu.matmul %7, %37, %cst_21 {dimension_numbers = #tpu.dot_dimension_numbers<[1], [0], [0], [1], [0, 0, 1, 1], [], []>} : vector<32x18xf32>, vector<18x128xf32>, vector<32x128xf32> -> vector<32x128xf32>
    %39 = arith.addf %38, %12 : vector<32x128xf32>
    %cst_22 = arith.constant 0.000000e+00 : f32
    %40 = vector.broadcast %cst_22 : f32 to vector<32x128xf32>
    %41 = arith.maximumf %39, %40 : vector<32x128xf32>
    %cst_23 = arith.constant dense<0.000000e+00> : vector<32x128xf32>
    %42 = tpu.matmul %8, %41, %cst_23 {dimension_numbers = #tpu.dot_dimension_numbers<[1], [0], [0], [1], [0, 0, 1, 1], [], []>} : vector<32x32xf32>, vector<32x128xf32>, vector<32x128xf32> -> vector<32x128xf32>
    %43 = arith.addf %42, %15 : vector<32x128xf32>
    %cst_24 = arith.constant 0.000000e+00 : f32
    %44 = vector.broadcast %cst_24 : f32 to vector<32x128xf32>
    %45 = arith.maximumf %43, %44 : vector<32x128xf32>
    %cst_25 = arith.constant dense<0.000000e+00> : vector<3x128xf32>
    %46 = tpu.matmul %9, %45, %cst_25 {dimension_numbers = #tpu.dot_dimension_numbers<[1], [0], [0], [1], [0, 0, 1, 1], [], []>} : vector<3x32xf32>, vector<32x128xf32>, vector<3x128xf32> -> vector<3x128xf32>
    %47 = arith.addf %46, %18 : vector<3x128xf32>
    %48 = vector.extract_strided_slice %37 {offsets = [15, 0], sizes = [3, 128], strides = [1, 1]} : vector<18x128xf32> to vector<3x128xf32>
    %49 = vector.extract_strided_slice %37 {offsets = [12, 0], sizes = [3, 128], strides = [1, 1]} : vector<18x128xf32> to vector<3x128xf32>
    %50 = arith.subf %48, %49 : vector<3x128xf32>
    %51 = arith.addf %48, %50 : vector<3x128xf32>
    %52 = arith.addf %51, %47 : vector<3x128xf32>
    %53 = vector.extract_strided_slice %1 {offsets = [3, 0], sizes = [3, 128], strides = [1, 1]} : vector<12x128xf32> to vector<3x128xf32>
    %54 = arith.select %6, %53, %52 : vector<3x128xi1>, vector<3x128xf32>
    %55 = vector.extract_strided_slice %37 {offsets = [3, 0], sizes = [15, 128], strides = [1, 1]} : vector<18x128xf32> to vector<15x128xf32>
    %56 = tpu.concatenate %55, %54 in 0 : vector<15x128xf32>, vector<3x128xf32> -> vector<18x128xf32>
    %cst_26 = arith.constant dense<0.000000e+00> : vector<32x128xf32>
    %57 = tpu.matmul %7, %56, %cst_26 {dimension_numbers = #tpu.dot_dimension_numbers<[1], [0], [0], [1], [0, 0, 1, 1], [], []>} : vector<32x18xf32>, vector<18x128xf32>, vector<32x128xf32> -> vector<32x128xf32>
    %58 = arith.addf %57, %12 : vector<32x128xf32>
    %cst_27 = arith.constant 0.000000e+00 : f32
    %59 = vector.broadcast %cst_27 : f32 to vector<32x128xf32>
    %60 = arith.maximumf %58, %59 : vector<32x128xf32>
    %cst_28 = arith.constant dense<0.000000e+00> : vector<32x128xf32>
    %61 = tpu.matmul %8, %60, %cst_28 {dimension_numbers = #tpu.dot_dimension_numbers<[1], [0], [0], [1], [0, 0, 1, 1], [], []>} : vector<32x32xf32>, vector<32x128xf32>, vector<32x128xf32> -> vector<32x128xf32>
    %62 = arith.addf %61, %15 : vector<32x128xf32>
    %cst_29 = arith.constant 0.000000e+00 : f32
    %63 = vector.broadcast %cst_29 : f32 to vector<32x128xf32>
    %64 = arith.maximumf %62, %63 : vector<32x128xf32>
    %cst_30 = arith.constant dense<0.000000e+00> : vector<3x128xf32>
    %65 = tpu.matmul %9, %64, %cst_30 {dimension_numbers = #tpu.dot_dimension_numbers<[1], [0], [0], [1], [0, 0, 1, 1], [], []>} : vector<3x32xf32>, vector<32x128xf32>, vector<3x128xf32> -> vector<3x128xf32>
    %66 = arith.addf %65, %18 : vector<3x128xf32>
    %67 = vector.extract_strided_slice %56 {offsets = [15, 0], sizes = [3, 128], strides = [1, 1]} : vector<18x128xf32> to vector<3x128xf32>
    %68 = vector.extract_strided_slice %56 {offsets = [12, 0], sizes = [3, 128], strides = [1, 1]} : vector<18x128xf32> to vector<3x128xf32>
    %69 = arith.subf %67, %68 : vector<3x128xf32>
    %70 = arith.addf %67, %69 : vector<3x128xf32>
    %71 = arith.addf %70, %66 : vector<3x128xf32>
    %72 = vector.extract_strided_slice %1 {offsets = [6, 0], sizes = [3, 128], strides = [1, 1]} : vector<12x128xf32> to vector<3x128xf32>
    %73 = arith.select %6, %72, %71 : vector<3x128xi1>, vector<3x128xf32>
    %74 = vector.extract_strided_slice %56 {offsets = [3, 0], sizes = [15, 128], strides = [1, 1]} : vector<18x128xf32> to vector<15x128xf32>
    %75 = tpu.concatenate %74, %73 in 0 : vector<15x128xf32>, vector<3x128xf32> -> vector<18x128xf32>
    %cst_31 = arith.constant dense<0.000000e+00> : vector<32x128xf32>
    %76 = tpu.matmul %7, %75, %cst_31 {dimension_numbers = #tpu.dot_dimension_numbers<[1], [0], [0], [1], [0, 0, 1, 1], [], []>} : vector<32x18xf32>, vector<18x128xf32>, vector<32x128xf32> -> vector<32x128xf32>
    %77 = arith.addf %76, %12 : vector<32x128xf32>
    %cst_32 = arith.constant 0.000000e+00 : f32
    %78 = vector.broadcast %cst_32 : f32 to vector<32x128xf32>
    %79 = arith.maximumf %77, %78 : vector<32x128xf32>
    %cst_33 = arith.constant dense<0.000000e+00> : vector<32x128xf32>
    %80 = tpu.matmul %8, %79, %cst_33 {dimension_numbers = #tpu.dot_dimension_numbers<[1], [0], [0], [1], [0, 0, 1, 1], [], []>} : vector<32x32xf32>, vector<32x128xf32>, vector<32x128xf32> -> vector<32x128xf32>
    %81 = arith.addf %80, %15 : vector<32x128xf32>
    %cst_34 = arith.constant 0.000000e+00 : f32
    %82 = vector.broadcast %cst_34 : f32 to vector<32x128xf32>
    %83 = arith.maximumf %81, %82 : vector<32x128xf32>
    %cst_35 = arith.constant dense<0.000000e+00> : vector<3x128xf32>
    %84 = tpu.matmul %9, %83, %cst_35 {dimension_numbers = #tpu.dot_dimension_numbers<[1], [0], [0], [1], [0, 0, 1, 1], [], []>} : vector<3x32xf32>, vector<32x128xf32>, vector<3x128xf32> -> vector<3x128xf32>
    %85 = arith.addf %84, %18 : vector<3x128xf32>
    %86 = vector.extract_strided_slice %75 {offsets = [15, 0], sizes = [3, 128], strides = [1, 1]} : vector<18x128xf32> to vector<3x128xf32>
    %87 = vector.extract_strided_slice %75 {offsets = [12, 0], sizes = [3, 128], strides = [1, 1]} : vector<18x128xf32> to vector<3x128xf32>
    %88 = arith.subf %86, %87 : vector<3x128xf32>
    %89 = arith.addf %86, %88 : vector<3x128xf32>
    %90 = arith.addf %89, %85 : vector<3x128xf32>
    %91 = vector.extract_strided_slice %1 {offsets = [9, 0], sizes = [3, 128], strides = [1, 1]} : vector<12x128xf32> to vector<3x128xf32>
    %92 = arith.select %6, %91, %90 : vector<3x128xi1>, vector<3x128xf32>
    %93 = tpu.concatenate %35, %54, %73, %92 in 0 : vector<3x128xf32>, vector<3x128xf32>, vector<3x128xf32>, vector<3x128xf32> -> vector<12x128xf32>
    %c0_36 = arith.constant 0 : index
    %c0_37 = arith.constant 0 : index
    %94 = vector.load %arg11[%c0_36, %c0_37] : memref<12x128xf32, #tpu.memory_space<vmem>>, vector<12x128xf32>
    tpu.vector_store %arg11[%c0_36, %c0_37], %93 {strides = array<i32>} : memref<12x128xf32, #tpu.memory_space<vmem>>, vector<12x128xf32>,
    %95 = arith.subf %93, %1 : vector<12x128xf32>
    %c0_38 = arith.constant 0 : index
    %c0_39 = arith.constant 0 : index
    %96 = vector.load %arg4[%c0_38, %c0_39] : memref<1x128xf32, #tpu.memory_space<vmem>>, vector<1x128xf32>
    %97 = vector.broadcast %96 : vector<1x128xf32> to vector<12x128xf32>
    %98 = arith.mulf %95, %97 : vector<12x128xf32>
    %99 = arith.mulf %98, %98 : vector<12x128xf32>
    %100 = vector.shape_cast %99 : vector<12x128xf32> to vector<1x12x128xf32>
    %cst_40 = arith.constant dense<0.000000e+00> : vector<1xf32>
    %101 = vector.multi_reduction <add>, %100, %cst_40 [1, 2] : vector<1x12x128xf32> to vector<1xf32>
    %102 = vector.shape_cast %101 : vector<1xf32> to vector<1x1x1xf32>
    %103 = vector.extract %102[0, 0, 0] : f32 from vector<1x1x1xf32>
    %104 = vector.broadcast %103 : f32 to vector<1x1xf32>
    %105 = vector.shape_cast %104 : vector<1x1xf32> to vector<1x1x1xf32>
    %c0_41 = arith.constant 0 : index
    %c0_42 = arith.constant 0 : index
    %c0_43 = arith.constant 0 : index
    %106 = vector.load %arg12[%c0_41, %c0_42, %c0_43] : memref<1x1x1xf32, #tpu.memory_space<vmem>>, vector<1x1x1xf32>
    tpu.vector_store %arg12[%c0_41, %c0_42, %c0_43], %105 {strides = array<i32>} : memref<1x1x1xf32, #tpu.memory_space<vmem>>, vector<1x1x1xf32>,
    return
  }
  func.func @transform_0(%arg0: i32) -> (i32, i32) {
    %c0_i32 = arith.constant 0 : i32
    %c0_i32_0 = arith.constant 0 : i32
    return %c0_i32, %arg0 : i32, i32
  }
  func.func @transform_1(%arg0: i32) -> (i32, i32) {
    %c0_i32 = arith.constant 0 : i32
    %c0_i32_0 = arith.constant 0 : i32
    return %c0_i32, %arg0 : i32, i32
  }
  func.func @transform_2(%arg0: i32) -> (i32, i32) {
    %c0_i32 = arith.constant 0 : i32
    %c0_i32_0 = arith.constant 0 : i32
    return %c0_i32, %arg0 : i32, i32
  }
  func.func @transform_3(%arg0: i32) -> (i32, i32) {
    %c0_i32 = arith.constant 0 : i32
    %c0_i32_0 = arith.constant 0 : i32
    return %c0_i32, %arg0 : i32, i32
  }
  func.func @transform_4(%arg0: i32) -> (i32, i32) {
    %c0_i32 = arith.constant 0 : i32
    %c0_i32_0 = arith.constant 0 : i32
    %c0_i32_1 = arith.constant 0 : i32
    return %c0_i32, %c0_i32_0 : i32, i32
  }
  func.func @transform_5(%arg0: i32) -> (i32, i32) {
    %c0_i32 = arith.constant 0 : i32
    %c0_i32_0 = arith.constant 0 : i32
    %c0_i32_1 = arith.constant 0 : i32
    return %c0_i32, %c0_i32_0 : i32, i32
  }
  func.func @transform_6(%arg0: i32) -> (i32, i32) {
    %c0_i32 = arith.constant 0 : i32
    %c0_i32_0 = arith.constant 0 : i32
    %c0_i32_1 = arith.constant 0 : i32
    return %c0_i32, %c0_i32_0 : i32, i32
  }
  func.func @transform_7(%arg0: i32) -> (i32, i32) {
    %c0_i32 = arith.constant 0 : i32
    %c0_i32_0 = arith.constant 0 : i32
    %c0_i32_1 = arith.constant 0 : i32
    return %c0_i32, %c0_i32_0 : i32, i32
  }
  func.func @transform_8(%arg0: i32) -> (i32, i32) {
    %c0_i32 = arith.constant 0 : i32
    %c0_i32_0 = arith.constant 0 : i32
    %c0_i32_1 = arith.constant 0 : i32
    return %c0_i32, %c0_i32_0 : i32, i32
  }
  func.func @transform_9(%arg0: i32) -> (i32, i32) {
    %c0_i32 = arith.constant 0 : i32
    %c0_i32_0 = arith.constant 0 : i32
    %c0_i32_1 = arith.constant 0 : i32
    return %c0_i32, %c0_i32_0 : i32, i32
  }
  func.func @transform_10(%arg0: i32) -> (i32, i32) {
    %c0_i32 = arith.constant 0 : i32
    %c0_i32_0 = arith.constant 0 : i32
    return %c0_i32, %arg0 : i32, i32
  }
  func.func @transform_11(%arg0: i32) -> (i32, i32, i32) {
    %c0_i32 = arith.constant 0 : i32
    %c0_i32_0 = arith.constant 0 : i32
    %c0_i32_1 = arith.constant 0 : i32
    return %arg0, %c0_i32, %c0_i32_0 : i32, i32, i32
  }
}

</mosaic_0001>

<llo_original>
// kernel: _lambda_.1
$region0: #{_lambda_.1}
  #allocation0 [shape = 'u32[]', space=smem, size = 0x4, offset = 0x4, fixed_abs, tag = 'smem constant byte address 0x4 - core index']
  #allocation1 [shape = 'u32[72,128]{1,0:T(1,128)}', space=vmem, size = 0x9000, scoped, tag = 'internal scratch']
  %s0 = inlined_call_operand.vmem [shape: f32[18,256], index: 0, kind: input, shape index: {}]
  %s1 = inlined_call_operand.vmem [shape: f32[12,256], index: 1, kind: input, shape index: {}]
  %s2 = inlined_call_operand.vmem [shape: s32[1,256], index: 2, kind: input, shape index: {}]
  %s3 = inlined_call_operand.vmem [shape: f32[1,256], index: 3, kind: input, shape index: {}]
  %s4 = inlined_call_operand.vmem [shape: f32[32,18], index: 4, kind: input, shape index: {}]
  %s5 = inlined_call_operand.vmem [shape: f32[32,1], index: 5, kind: input, shape index: {}]
  %s6 = inlined_call_operand.vmem [shape: f32[32,32], index: 6, kind: input, shape index: {}]
  %s7 = inlined_call_operand.vmem [shape: f32[32,1], index: 7, kind: input, shape index: {}]
  %s8 = inlined_call_operand.vmem [shape: f32[3,32], index: 8, kind: input, shape index: {}]
  %s9 = inlined_call_operand.vmem [shape: f32[3,1], index: 9, kind: input, shape index: {}]
  %s10 = inlined_call_operand.vmem [shape: f32[12,256], index: 10, kind: output, shape index: {0}]
  %s11 = inlined_call_operand.vmem [shape: f32[2,1,1], index: 11, kind: output, shape index: {1}]
  %12 = xla_tuple %s10, %s11
  %s13 = sld [smem:[#allocation0]]
  $region191: #{_lambda_.1} parent=0
    _
  %s15 = ssub.s32 1, %s13
  %s16 = scalar_select 0, %s15, %s13
  $region1: #{_lambda_.1} parent=0
    #allocation2 [shape = 'u8[24576]{0}', space=vmem, size = 0x6000, scoped, tag = 'input window, operand 0']
    #allocation3 [shape = 'u8[16384]{0}', space=vmem, size = 0x4000, scoped, tag = 'input window, operand 1']
    #allocation4 [shape = 'u8[16384]{0}', space=vmem, size = 0x4000, scoped, tag = 'output window, operand 0']
    loop: start=0, step=1, limit=4
    $region2: #{_lambda_.1} parent=1 // loop_pre_header
      _
    $region3: #{_lambda_.1} parent=1 // loop_header
      %s18 = sphi 0, %s22
      %p19 = scmp.ge.s32.totalorder %s18, 4
      %s28 = sphi 0, %s30
      %s31 = sphi 0, %s28
      %s32 = sphi 0, %s31
      %s48 = sphi 0, %s32
      %s54 = sphi 0, %s56
      %s57 = sphi 0, %s54
      %s58 = sphi 0, %s57
      %s74 = sphi 0, %s58
      %s80 = sphi 0, %s82
      %s83 = sphi 0, %s80
      %s84 = sphi 0, %s83
      %s100 = sphi 0, %s84
      %s106 = sphi 0, %s108
      %s109 = sphi 0, %s106
      %s110 = sphi 0, %s109
      %s126 = sphi 0, %s110
      %s130 = sphi 0, %s130
      %s132 = sphi 0, %s130
      %s133 = sphi 0, %s132
      %s147 = sphi 0, %s133
      %s151 = sphi 0, %s151
      %s153 = sphi 0, %s151
      %s154 = sphi 0, %s153
      %s168 = sphi 0, %s154
      %s172 = sphi 0, %s172
      %s174 = sphi 0, %s172
      %s175 = sphi 0, %s174
      %s189 = sphi 0, %s175
      %s193 = sphi 0, %s193
      %s195 = sphi 0, %s193
      %s196 = sphi 0, %s195
      %s210 = sphi 0, %s196
      %s214 = sphi 0, %s214
      %s216 = sphi 0, %s214
      %s217 = sphi 0, %s216
      %s231 = sphi 0, %s217
      %s235 = sphi 0, %s235
      %s237 = sphi 0, %s235
      %s238 = sphi 0, %s237
      %s252 = sphi 0, %s238
      %s258 = sphi 0, %s260
      %s261 = sphi 0, %s258
      %s262 = sphi 0, %s261
      %s278 = sphi 0, %s262
      %s284 = sphi 0, %s286
      %s287 = sphi 0, %s284
      %s288 = sphi 0, %s287
      %s304 = sphi 0, %s288
    $region4: #{_lambda_.1} parent=1 // loop_header_branch
      %21 = sbr.rel (%p19) target = $region8
    $region5: #{_lambda_.1} parent=1 // loop_body
      %s23 = ssub.s32 %s18, 1
      %s24 = ssub.s32 %s18, 2
      %s25 = sadd.s32 %s18, 1
      %s26 = ssub.s32 %s18, %s25
      %p27 = scmp.eq.s32.totalorder %s26, 0
      %s29 = sadd.s32 %s28, 1
      %s30 = scalar_select %p27, %s28, %s29
      %p33 = pneg %p27
      %p34 = scmp.eq.s32.totalorder %s18, 1
      %p35 = por %p33, %p34
      %p36 = scmp.ne.s32.totalorder %s28, %s31
      %p37 = scmp.eq.s32.totalorder %s18, 0
      %p38 = por %p36, %p37
      %p39 = scmp.ne.s32.totalorder %s28, %s31
      %p40 = scmp.eq.s32.totalorder %s23, 1
      %p41 = por %p39, %p40
      %p42 = scmp.ne.s32.totalorder %s31, %s32
      %p43 = scmp.eq.s32.totalorder %s23, 0
      %p44 = por %p42, %p43
      %p45 = scmp.ne.s32.totalorder %s31, %s32
      %p46 = scmp.eq.s32.totalorder %s24, 1
      %p47 = por %p45, %p46
      %p49 = scmp.ne.s32.totalorder %s32, %s48
      %p50 = scmp.eq.s32.totalorder %s24, 0
      %p51 = por %p49, %p50
      %s52 = ssub.s32 %s18, %s25
      %p53 = scmp.eq.s32.totalorder %s52, 0
      %s55 = sadd.s32 %s54, 1
      %s56 = scalar_select %p53, %s54, %s55
      %p59 = pneg %p53
      %p60 = scmp.eq.s32.totalorder %s18, 1
      %p61 = por %p59, %p60
      %p62 = scmp.ne.s32.totalorder %s54, %s57
      %p63 = scmp.eq.s32.totalorder %s18, 0
      %p64 = por %p62, %p63
      %p65 = scmp.ne.s32.totalorder %s54, %s57
      %p66 = scmp.eq.s32.totalorder %s23, 1
      %p67 = por %p65, %p66
      %p68 = scmp.ne.s32.totalorder %s57, %s58
      %p69 = scmp.eq.s32.totalorder %s23, 0
      %p70 = por %p68, %p69
      %p71 = scmp.ne.s32.totalorder %s57, %s58
      %p72 = scmp.eq.s32.totalorder %s24, 1
      %p73 = por %p71, %p72
      %p75 = scmp.ne.s32.totalorder %s58, %s74
      %p76 = scmp.eq.s32.totalorder %s24, 0
      %p77 = por %p75, %p76
      %s78 = ssub.s32 %s18, %s25
      %p79 = scmp.eq.s32.totalorder %s78, 0
      %s81 = sadd.s32 %s80, 1
      %s82 = scalar_select %p79, %s80, %s81
      %p85 = pneg %p79
      %p86 = scmp.eq.s32.totalorder %s18, 1
      %p87 = por %p85, %p86
      %p88 = scmp.ne.s32.totalorder %s80, %s83
      %p89 = scmp.eq.s32.totalorder %s18, 0
      %p90 = por %p88, %p89
      %p91 = scmp.ne.s32.totalorder %s80, %s83
      %p92 = scmp.eq.s32.totalorder %s23, 1
      %p93 = por %p91, %p92
      %p94 = scmp.ne.s32.totalorder %s83, %s84
      %p95 = scmp.eq.s32.totalorder %s23, 0
      %p96 = por %p94, %p95
      %p97 = scmp.ne.s32.totalorder %s83, %s84
      %p98 = scmp.eq.s32.totalorder %s24, 1
      %p99 = por %p97, %p98
      %p101 = scmp.ne.s32.totalorder %s84, %s100
      %p102 = scmp.eq.s32.totalorder %s24, 0
      %p103 = por %p101, %p102
      %s104 = ssub.s32 %s18, %s25
      %p105 = scmp.eq.s32.totalorder %s104, 0
      %s107 = sadd.s32 %s106, 1
      %s108 = scalar_select %p105, %s106, %s107
      %p111 = pneg %p105
      %p112 = scmp.eq.s32.totalorder %s18, 1
      %p113 = por %p111, %p112
      %p114 = scmp.ne.s32.totalorder %s106, %s109
      %p115 = scmp.eq.s32.totalorder %s18, 0
      %p116 = por %p114, %p115
      %p117 = scmp.ne.s32.totalorder %s106, %s109
      %p118 = scmp.eq.s32.totalorder %s23, 1
      %p119 = por %p117, %p118
      %p120 = scmp.ne.s32.totalorder %s109, %s110
      %p121 = scmp.eq.s32.totalorder %s23, 0
      %p122 = por %p120, %p121
      %p123 = scmp.ne.s32.totalorder %s109, %s110
      %p124 = scmp.eq.s32.totalorder %s24, 1
      %p125 = por %p123, %p124
      %p127 = scmp.ne.s32.totalorder %s110, %s126
      %p128 = scmp.eq.s32.totalorder %s24, 0
      %p129 = por %p127, %p128
      %s131 = sadd.s32 %s130, 1
      %p134 = scmp.eq.s32.totalorder %s18, 1
      %p135 = scmp.ne.s32.totalorder %s130, %s132
      %p136 = scmp.eq.s32.totalorder %s18, 0
      %p137 = por %p135, %p136
      %p138 = scmp.ne.s32.totalorder %s130, %s132
      %p139 = scmp.eq.s32.totalorder %s23, 1
      %p140 = por %p138, %p139
      %p141 = scmp.ne.s32.totalorder %s132, %s133
      %p142 = scmp.eq.s32.totalorder %s23, 0
      %p143 = por %p141, %p142
      %p144 = scmp.ne.s32.totalorder %s132, %s133
      %p145 = scmp.eq.s32.totalorder %s24, 1
      %p146 = por %p144, %p145
      %p148 = scmp.ne.s32.totalorder %s133, %s147
      %p149 = scmp.eq.s32.totalorder %s24, 0
      %p150 = por %p148, %p149
      %s152 = sadd.s32 %s151, 1
      %p155 = scmp.eq.s32.totalorder %s18, 1
      %p156 = scmp.ne.s32.totalorder %s151, %s153
      %p157 = scmp.eq.s32.totalorder %s18, 0
      %p158 = por %p156, %p157
      %p159 = scmp.ne.s32.totalorder %s151, %s153
      %p160 = scmp.eq.s32.totalorder %s23, 1
      %p161 = por %p159, %p160
      %p162 = scmp.ne.s32.totalorder %s153, %s154
      %p163 = scmp.eq.s32.totalorder %s23, 0
      %p164 = por %p162, %p163
      %p165 = scmp.ne.s32.totalorder %s153, %s154
      %p166 = scmp.eq.s32.totalorder %s24, 1
      %p167 = por %p165, %p166
      %p169 = scmp.ne.s32.totalorder %s154, %s168
      %p170 = scmp.eq.s32.totalorder %s24, 0
      %p171 = por %p169, %p170
      %s173 = sadd.s32 %s172, 1
      %p176 = scmp.eq.s32.totalorder %s18, 1
      %p177 = scmp.ne.s32.totalorder %s172, %s174
      %p178 = scmp.eq.s32.totalorder %s18, 0
      %p179 = por %p177, %p178
      %p180 = scmp.ne.s32.totalorder %s172, %s174
      %p181 = scmp.eq.s32.totalorder %s23, 1
      %p182 = por %p180, %p181
      %p183 = scmp.ne.s32.totalorder %s174, %s175
      %p184 = scmp.eq.s32.totalorder %s23, 0
      %p185 = por %p183, %p184
      %p186 = scmp.ne.s32.totalorder %s174, %s175
      %p187 = scmp.eq.s32.totalorder %s24, 1
      %p188 = por %p186, %p187
      %p190 = scmp.ne.s32.totalorder %s175, %s189
      %p191 = scmp.eq.s32.totalorder %s24, 0
      %p192 = por %p190, %p191
      %s194 = sadd.s32 %s193, 1
      %p197 = scmp.eq.s32.totalorder %s18, 1
      %p198 = scmp.ne.s32.totalorder %s193, %s195
      %p199 = scmp.eq.s32.totalorder %s18, 0
      %p200 = por %p198, %p199
      %p201 = scmp.ne.s32.totalorder %s193, %s195
      %p202 = scmp.eq.s32.totalorder %s23, 1
      %p203 = por %p201, %p202
      %p204 = scmp.ne.s32.totalorder %s195, %s196
      %p205 = scmp.eq.s32.totalorder %s23, 0
      %p206 = por %p204, %p205
      %p207 = scmp.ne.s32.totalorder %s195, %s196
      %p208 = scmp.eq.s32.totalorder %s24, 1
      %p209 = por %p207, %p208
      %p211 = scmp.ne.s32.totalorder %s196, %s210
      %p212 = scmp.eq.s32.totalorder %s24, 0
      %p213 = por %p211, %p212
      %s215 = sadd.s32 %s214, 1
      %p218 = scmp.eq.s32.totalorder %s18, 1
      %p219 = scmp.ne.s32.totalorder %s214, %s216
      %p220 = scmp.eq.s32.totalorder %s18, 0
      %p221 = por %p219, %p220
      %p222 = scmp.ne.s32.totalorder %s214, %s216
      %p223 = scmp.eq.s32.totalorder %s23, 1
      %p224 = por %p222, %p223
      %p225 = scmp.ne.s32.totalorder %s216, %s217
      %p226 = scmp.eq.s32.totalorder %s23, 0
      %p227 = por %p225, %p226
      %p228 = scmp.ne.s32.totalorder %s216, %s217
      %p229 = scmp.eq.s32.totalorder %s24, 1
      %p230 = por %p228, %p229
      %p232 = scmp.ne.s32.totalorder %s217, %s231
      %p233 = scmp.eq.s32.totalorder %s24, 0
      %p234 = por %p232, %p233
      %s236 = sadd.s32 %s235, 1
      %p239 = scmp.eq.s32.totalorder %s18, 1
      %p240 = scmp.ne.s32.totalorder %s235, %s237
      %p241 = scmp.eq.s32.totalorder %s18, 0
      %p242 = por %p240, %p241
      %p243 = scmp.ne.s32.totalorder %s235, %s237
      %p244 = scmp.eq.s32.totalorder %s23, 1
      %p245 = por %p243, %p244
      %p246 = scmp.ne.s32.totalorder %s237, %s238
      %p247 = scmp.eq.s32.totalorder %s23, 0
      %p248 = por %p246, %p247
      %p249 = scmp.ne.s32.totalorder %s237, %s238
      %p250 = scmp.eq.s32.totalorder %s24, 1
      %p251 = por %p249, %p250
      %p253 = scmp.ne.s32.totalorder %s238, %s252
      %p254 = scmp.eq.s32.totalorder %s24, 0
      %p255 = por %p253, %p254
      %s256 = ssub.s32 %s18, %s25
      %p257 = scmp.eq.s32.totalorder %s256, 0
      %s259 = sadd.s32 %s258, 1
      %s260 = scalar_select %p257, %s258, %s259
      %p263 = pneg %p257
      %p264 = scmp.eq.s32.totalorder %s18, 1
      %p265 = por %p263, %p264
      %p266 = scmp.ne.s32.totalorder %s258, %s261
      %p267 = scmp.eq.s32.totalorder %s18, 0
      %p268 = por %p266, %p267
      %p269 = scmp.ne.s32.totalorder %s258, %s261
      %p270 = scmp.eq.s32.totalorder %s23, 1
      %p271 = por %p269, %p270
      %p272 = scmp.ne.s32.totalorder %s261, %s262
      %p273 = scmp.eq.s32.totalorder %s23, 0
      %p274 = por %p272, %p273
      %p275 = scmp.ne.s32.totalorder %s261, %s262
      %p276 = scmp.eq.s32.totalorder %s24, 1
      %p277 = por %p275, %p276
      %p279 = scmp.ne.s32.totalorder %s262, %s278
      %p280 = scmp.eq.s32.totalorder %s24, 0
      %p281 = por %p279, %p280
      %s282 = ssub.s32 %s18, %s25
      %p283 = scmp.eq.s32.totalorder %s282, 0
      %s285 = sadd.s32 %s284, 1
      %s286 = scalar_select %p283, %s284, %s285
      %p289 = pneg %p283
      %p290 = scmp.eq.s32.totalorder %s18, 1
      %p291 = por %p289, %p290
      %p292 = scmp.ne.s32.totalorder %s284, %s287
      %p293 = scmp.eq.s32.totalorder %s18, 0
      %p294 = por %p292, %p293
      %p295 = scmp.ne.s32.totalorder %s284, %s287
      %p296 = scmp.eq.s32.totalorder %s23, 1
      %p297 = por %p295, %p296
      %p298 = scmp.ne.s32.totalorder %s287, %s288
      %p299 = scmp.eq.s32.totalorder %s23, 0
      %p300 = por %p298, %p299
      %p301 = scmp.ne.s32.totalorder %s287, %s288
      %p302 = scmp.eq.s32.totalorder %s24, 1
      %p303 = por %p301, %p302
      %p305 = scmp.ne.s32.totalorder %s288, %s304
      %p306 = scmp.eq.s32.totalorder %s24, 0
      %p307 = por %p305, %p306
      %p308 = scmp.le.s32.totalorder 1, %s18
      %p309 = scmp.lt.s32.totalorder %s18, 3
      %p310 = pnand %p308, %p309
      %p311 = pneg %p310
      // Predicated region
      $region9: #{_lambda_.1} parent=5 // pred_check
        _
      $region10: #{_lambda_.1} parent=5 // pred_check_branch
        %313 = sbr.rel (%p310) target = $region12
      $region11: #{_lambda_.1} parent=5 // pred_region
        %s314 = ssub.s32 %s18, 1
        // Predicated region
        $region13: #{_lambda_.1} parent=11 // pred_check
          %p315 = pneg %p143
        $region14: #{_lambda_.1} parent=11 // pred_check_branch
          %317 = sbr.rel (%p315) target = $region16
        $region15: #{_lambda_.1} parent=11 // pred_region
          _
        $region16: #{_lambda_.1} parent=11 // pred_fallthru
          _
        // Predicated region
        $region17: #{_lambda_.1} parent=11 // pred_check
          %p318 = pneg %p164
        $region18: #{_lambda_.1} parent=11 // pred_check_branch
          %320 = sbr.rel (%p318) target = $region20
        $region19: #{_lambda_.1} parent=11 // pred_region
          _
        $region20: #{_lambda_.1} parent=11 // pred_fallthru
          _
        // Predicated region
        $region21: #{_lambda_.1} parent=11 // pred_check
          %p321 = pneg %p185
        $region22: #{_lambda_.1} parent=11 // pred_check_branch
          %323 = sbr.rel (%p321) target = $region24
        $region23: #{_lambda_.1} parent=11 // pred_region
          _
        $region24: #{_lambda_.1} parent=11 // pred_fallthru
          _
        // Predicated region
        $region25: #{_lambda_.1} parent=11 // pred_check
          %p324 = pneg %p206
        $region26: #{_lambda_.1} parent=11 // pred_check_branch
          %326 = sbr.rel (%p324) target = $region28
        $region27: #{_lambda_.1} parent=11 // pred_region
          _
        $region28: #{_lambda_.1} parent=11 // pred_fallthru
          _
        // Predicated region
        $region29: #{_lambda_.1} parent=11 // pred_check
          %p327 = pneg %p227
        $region30: #{_lambda_.1} parent=11 // pred_check_branch
          %329 = sbr.rel (%p327) target = $region32
        $region31: #{_lambda_.1} parent=11 // pred_region
          _
        $region32: #{_lambda_.1} parent=11 // pred_fallthru
          _
        // Predicated region
        $region33: #{_lambda_.1} parent=11 // pred_check
          %p330 = pneg %p248
        $region34: #{_lambda_.1} parent=11 // pred_check_branch
          %332 = sbr.rel (%p330) target = $region36
        $region35: #{_lambda_.1} parent=11 // pred_region
          _
        $region36: #{_lambda_.1} parent=11 // pred_fallthru
          _
      $region12: #{_lambda_.1} parent=5 // pred_fallthru
        _
      %p333 = scmp.lt.s32.totalorder %s18, 2
      // Predicated region
      $region37: #{_lambda_.1} parent=5 // pred_check
        %p334 = pneg %p333
      $region38: #{_lambda_.1} parent=5 // pred_check_branch
        %336 = sbr.rel (%p334) target = $region40
      $region39: #{_lambda_.1} parent=5 // pred_region
        // Predicated region
        $region41: #{_lambda_.1} parent=39 // pred_check
          %p337 = pneg %p38
        $region42: #{_lambda_.1} parent=39 // pred_check_branch
          %339 = sbr.rel (%p337) target = $region44
        $region43: #{_lambda_.1} parent=39 // pred_region
          %s340 = sand.u32 %s28, 1
          %s341 = sand.u32 %s28, 1
          %s342 = smul.addr %s341, 24
          %s343 = scalar_lea.vmem [#allocation2], %s342
          %s344 = smul.addr %s18, 8
          %s345 = scalar_lea.vmem %s0, %s344
          // Predicated region
          $region45: #{_lambda_.1} parent=43 // pred_check
            _
          $region46: #{_lambda_.1} parent=43 // pred_check_branch
            %347 = sbr.rel (0) target = $region48
          $region47: #{_lambda_.1} parent=43 // pred_region
            // Predicated region
            $region49: #{_lambda_.1} parent=47 // pred_check
              _
            $region50: #{_lambda_.1} parent=47 // pred_check_branch
              %349 = sbr.rel (0) target = $region52
            $region51: #{_lambda_.1} parent=47 // pred_region
              // Predicated region
              $region64: #{_lambda_.1} parent=51 // pred_check
                _
              $region65: #{_lambda_.1} parent=51 // pred_check_branch
                %369 = sbr.rel (0) target = $region67
              $region66: #{_lambda_.1} parent=51 // pred_region
                loop: start=0, step=1, limit=1
                $region68: #{_lambda_.1} parent=66 // loop_pre_header
                  _
                $region69: #{_lambda_.1} parent=66 // loop_header
                  %s371 = sphi 0, %s375
                  %p372 = scmp.ge.s32.totalorder %s371, 1
                  %s376 = sphi %s345, %s345
                  %s377 = sphi %s343, %s343
                $region70: #{_lambda_.1} parent=66 // loop_header_branch
                  %374 = sbr.rel (%p372) target = $region74
                $region71: #{_lambda_.1} parent=66 // loop_body
                  %v378 = vld [vmem:[%s376] sm:$0xff]
                  %379 = vst [vmem:[%s377] sm:$0xff] %v378
                  %v380 = vld [vmem:[%s376 + $0x10] sm:$0xff]
                  %381 = vst [vmem:[%s377 + $0x8] sm:$0xff] %v380
                  %v382 = vld [vmem:[%s376 + $0x20] sm:$0xff]
                  %383 = vst [vmem:[%s377 + $0x10] sm:$0xff] %v382
                $region72: #{_lambda_.1} parent=66 // loop_footer
                  %s375 = sadd.s32 1, %s371
                $region73: #{_lambda_.1} parent=66 // loop_footer_branch
                  %370 = sbr.rel target = $region69
                $region74: #{_lambda_.1} parent=66 // loop_exit
                  _
              $region67: #{_lambda_.1} parent=51 // pred_fallthru
                _
              // Predicated region
              $region75: #{_lambda_.1} parent=51 // pred_check
                _
              $region76: #{_lambda_.1} parent=51 // pred_check_branch
                %385 = sbr.rel target = $region78
              $region77: #{_lambda_.1} parent=51 // pred_region
                _
              $region78: #{_lambda_.1} parent=51 // pred_fallthru
                _
            $region52: #{_lambda_.1} parent=47 // pred_fallthru
              _
            // Predicated region
            $region53: #{_lambda_.1} parent=47 // pred_check
              _
            $region54: #{_lambda_.1} parent=47 // pred_check_branch
              %351 = sbr.rel target = $region56
            $region55: #{_lambda_.1} parent=47 // pred_region
              %s353 = ssub.s32 256, 1
              loop: start=0, step=1, limit=1
              $region57: #{_lambda_.1} parent=55 // loop_pre_header
                _
              $region58: #{_lambda_.1} parent=55 // loop_header
                %s355 = sphi 0, %s359
                %p356 = scmp.ge.s32.totalorder %s355, 1
                %s360 = sphi %s345, %s345
                %s361 = sphi %s343, %s343
              $region59: #{_lambda_.1} parent=55 // loop_header_branch
                %358 = sbr.rel (%p356) target = $region63
              $region60: #{_lambda_.1} parent=55 // loop_body
                %v362 = vld [vmem:[%s360] sm:%s353]
                %363 = vst [vmem:[%s361] sm:%s353] %v362
                %v364 = vld [vmem:[%s360 + $0x10] sm:%s353]
                %365 = vst [vmem:[%s361 + $0x8] sm:%s353] %v364
                %v366 = vld [vmem:[%s360 + $0x20] sm:%s353]
                %367 = vst [vmem:[%s361 + $0x10] sm:%s353] %v366
              $region61: #{_lambda_.1} parent=55 // loop_footer
                %s359 = sadd.s32 1, %s355
              $region62: #{_lambda_.1} parent=55 // loop_footer_branch
                %354 = sbr.rel target = $region58
              $region63: #{_lambda_.1} parent=55 // loop_exit
                _
            $region56: #{_lambda_.1} parent=47 // pred_fallthru
              _
          $region48: #{_lambda_.1} parent=43 // pred_fallthru
            _
          %386 = vnop
        $region44: #{_lambda_.1} parent=39 // pred_fallthru
          _
        // Predicated region
        $region79: #{_lambda_.1} parent=39 // pred_check
          %p387 = pneg %p64
        $region80: #{_lambda_.1} parent=39 // pred_check_branch
          %389 = sbr.rel (%p387) target = $region82
        $region81: #{_lambda_.1} parent=39 // pred_region
          %s390 = sand.u32 %s54, 1
          %s391 = sand.u32 %s54, 1
          %s392 = smul.addr %s391, 16
          %s393 = scalar_lea.vmem [#allocation3], %s392
          %s394 = smul.addr %s18, 8
          %s395 = scalar_lea.vmem %s1, %s394
          // Predicated region
          $region83: #{_lambda_.1} parent=81 // pred_check
            _
          $region84: #{_lambda_.1} parent=81 // pred_check_branch
            %397 = sbr.rel (0) target = $region86
          $region85: #{_lambda_.1} parent=81 // pred_region
            // Predicated region
            $region87: #{_lambda_.1} parent=85 // pred_check
              _
            $region88: #{_lambda_.1} parent=85 // pred_check_branch
              %399 = sbr.rel (0) target = $region90
            $region89: #{_lambda_.1} parent=85 // pred_region
              // Predicated region
              $region102: #{_lambda_.1} parent=89 // pred_check
                _
              $region103: #{_lambda_.1} parent=89 // pred_check_branch
                %417 = sbr.rel (0) target = $region105
              $region104: #{_lambda_.1} parent=89 // pred_region
                loop: start=0, step=1, limit=1
                $region106: #{_lambda_.1} parent=104 // loop_pre_header
                  _
                $region107: #{_lambda_.1} parent=104 // loop_header
                  %s419 = sphi 0, %s423
                  %p420 = scmp.ge.s32.totalorder %s419, 1
                  %s424 = sphi %s395, %s395
                  %s425 = sphi %s393, %s393
                $region108: #{_lambda_.1} parent=104 // loop_header_branch
                  %422 = sbr.rel (%p420) target = $region112
                $region109: #{_lambda_.1} parent=104 // loop_body
                  %v426 = vld [vmem:[%s424] sm:$0xff]
                  %427 = vst [vmem:[%s425] sm:$0xff] %v426
                  %v428 = vld [vmem:[%s424 + $0x10] sm:$0xff]
                  %429 = vst [vmem:[%s425 + $0x8] sm:$0xff] %v428
                $region110: #{_lambda_.1} parent=104 // loop_footer
                  %s423 = sadd.s32 1, %s419
                $region111: #{_lambda_.1} parent=104 // loop_footer_branch
                  %418 = sbr.rel target = $region107
                $region112: #{_lambda_.1} parent=104 // loop_exit
                  _
              $region105: #{_lambda_.1} parent=89 // pred_fallthru
                _
              // Predicated region
              $region113: #{_lambda_.1} parent=89 // pred_check
                _
              $region114: #{_lambda_.1} parent=89 // pred_check_branch
                %431 = sbr.rel target = $region116
              $region115: #{_lambda_.1} parent=89 // pred_region
                _
              $region116: #{_lambda_.1} parent=89 // pred_fallthru
                _
            $region90: #{_lambda_.1} parent=85 // pred_fallthru
              _
            // Predicated region
            $region91: #{_lambda_.1} parent=85 // pred_check
              _
            $region92: #{_lambda_.1} parent=85 // pred_check_branch
              %401 = sbr.rel target = $region94
            $region93: #{_lambda_.1} parent=85 // pred_region
              %s403 = ssub.s32 256, 1
              loop: start=0, step=1, limit=1
              $region95: #{_lambda_.1} parent=93 // loop_pre_header
                _
              $region96: #{_lambda_.1} parent=93 // loop_header
                %s405 = sphi 0, %s409
                %p406 = scmp.ge.s32.totalorder %s405, 1
                %s410 = sphi %s395, %s395
                %s411 = sphi %s393, %s393
              $region97: #{_lambda_.1} parent=93 // loop_header_branch
                %408 = sbr.rel (%p406) target = $region101
              $region98: #{_lambda_.1} parent=93 // loop_body
                %v412 = vld [vmem:[%s410] sm:%s403]
                %413 = vst [vmem:[%s411] sm:%s403] %v412
                %v414 = vld [vmem:[%s410 + $0x10] sm:%s403]
                %415 = vst [vmem:[%s411 + $0x8] sm:%s403] %v414
              $region99: #{_lambda_.1} parent=93 // loop_footer
                %s409 = sadd.s32 1, %s405
              $region100: #{_lambda_.1} parent=93 // loop_footer_branch
                %404 = sbr.rel target = $region96
              $region101: #{_lambda_.1} parent=93 // loop_exit
                _
            $region94: #{_lambda_.1} parent=85 // pred_fallthru
              _
          $region86: #{_lambda_.1} parent=81 // pred_fallthru
            _
          %432 = vnop
        $region82: #{_lambda_.1} parent=39 // pred_fallthru
          _
        // Predicated region
        $region117: #{_lambda_.1} parent=39 // pred_check
          %p433 = pneg %p90
        $region118: #{_lambda_.1} parent=39 // pred_check_branch
          %435 = sbr.rel (%p433) target = $region120
        $region119: #{_lambda_.1} parent=39 // pred_region
          %p436 = scmp.lt.s32.totalorder %s18, 1
          %s437 = scalar_select %p436, %s18, 1
          %s438 = scalar_lea.vmem %s2, %s437
        $region120: #{_lambda_.1} parent=39 // pred_fallthru
          _
        // Predicated region
        $region121: #{_lambda_.1} parent=39 // pred_check
          %p439 = pneg %p116
        $region122: #{_lambda_.1} parent=39 // pred_check_branch
          %441 = sbr.rel (%p439) target = $region124
        $region123: #{_lambda_.1} parent=39 // pred_region
          %p442 = scmp.lt.s32.totalorder %s18, 1
          %s443 = scalar_select %p442, %s18, 1
          %s444 = scalar_lea.vmem %s3, %s443
        $region124: #{_lambda_.1} parent=39 // pred_fallthru
          _
      $region40: #{_lambda_.1} parent=5 // pred_fallthru
        _
      %p445 = scmp.le.s32.totalorder 1, %s18
      %p446 = scmp.lt.s32.totalorder %s18, 3
      %p447 = pnand %p445, %p446
      %p448 = pneg %p447
      // Predicated region
      $region125: #{_lambda_.1} parent=5 // pred_check
        _
      $region126: #{_lambda_.1} parent=5 // pred_check_branch
        %450 = sbr.rel (%p447) target = $region128
      $region127: #{_lambda_.1} parent=5 // pred_region
        %s451 = ssub.s32 %s18, 1
        %s452 = sand.u32 %s31, 1
        %s453 = sand.u32 %s31, 1
        %s454 = smul.addr %s453, 24
        %s455 = scalar_lea.vmem [#allocation2], %s454
        // Predicated region
        $region129: #{_lambda_.1} parent=127 // pred_check
          %p456 = pneg %p44
        $region130: #{_lambda_.1} parent=127 // pred_check_branch
          %458 = sbr.rel (%p456) target = $region132
        $region131: #{_lambda_.1} parent=127 // pred_region
          _
        $region132: #{_lambda_.1} parent=127 // pred_fallthru
          _
        %s459 = sand.u32 %s57, 1
        %s460 = sand.u32 %s57, 1
        %s461 = smul.addr %s460, 16
        %s462 = scalar_lea.vmem [#allocation3], %s461
        // Predicated region
        $region133: #{_lambda_.1} parent=127 // pred_check
          %p463 = pneg %p70
        $region134: #{_lambda_.1} parent=127 // pred_check_branch
          %465 = sbr.rel (%p463) target = $region136
        $region135: #{_lambda_.1} parent=127 // pred_region
          _
        $region136: #{_lambda_.1} parent=127 // pred_fallthru
          _
        %s466 = sand.u32 %s31, 1
        %s467 = sand.u32 %s31, 1
        %s468 = smul.addr %s467, 24
        %s469 = scalar_lea.vmem [#allocation2], %s468
        %p470 = pneg %p44
        %p471 = pneg %p41
        %s472 = sand.u32 %s57, 1
        %s473 = sand.u32 %s57, 1
        %s474 = smul.addr %s473, 16
        %s475 = scalar_lea.vmem [#allocation3], %s474
        %p476 = pneg %p70
        %p477 = pneg %p67
        %p478 = scmp.lt.s32.totalorder %s23, 1
        %s479 = scalar_select %p478, %s23, 1
        %s480 = scalar_lea.vmem %s2, %s479
        %p481 = pneg %p96
        %p482 = pneg %p93
        %p483 = scmp.lt.s32.totalorder %s23, 1
        %s484 = scalar_select %p483, %s23, 1
        %s485 = scalar_lea.vmem %s3, %s484
        %p486 = pneg %p122
        %p487 = pneg %p119
        %p488 = pneg %p143
        %p489 = pneg %p140
        %p490 = pneg %p164
        %p491 = pneg %p161
        %p492 = pneg %p185
        %p493 = pneg %p182
        %p494 = pneg %p206
        %p495 = pneg %p203
        %p496 = pneg %p227
        %p497 = pneg %p224
        %p498 = pneg %p248
        %p499 = pneg %p245
        %p500 = pneg %p274
        %p501 = pneg %p271
        %s502 = sand.u32 %s261, 1
        %s503 = sand.u32 %s261, 1
        %s504 = smul.addr %s503, 16
        %s505 = scalar_lea.vmem [#allocation4], %s504
        %p506 = pneg %p300
        %p507 = pneg %p297
        %p508 = scmp.lt.s32.totalorder %s23, 1
        %s509 = scalar_select %p508, %s23, 1
        %s510 = scalar_lea.vmem %s11, %s509
        %p511 = scmp.lt.s32.totalorder %s23, 1
        %s512 = scalar_select %p511, %s23, 1
        %s513 = scalar_lea.vmem %s2, %s512
        %p514 = scmp.lt.s32.totalorder %s23, 1
        %s515 = scalar_select %p514, %s23, 1
        %s516 = scalar_lea.vmem %s3, %s515
        %p517 = scmp.lt.s32.totalorder %s23, 1
        %s518 = scalar_select %p517, %s23, 1
        %s519 = scalar_lea.vmem %s11, %s518
        %v520 = vld [vmem:[%s455] sm:$0xff]
        %v521 = vld [vmem:[%s455 + $0x8] sm:$0xff]
        %v522 = vld [vmem:[%s455 + $0x10] sm:$0x3]
        %v523 = vld [vmem:[%s462] sm:$0xff]
        %v524 = vld [vmem:[%s462 + $0x8] sm:$0xf]
        %v525 = vld [vmem:[%s513] sm:$0x1]
        %vm526 = vcmp.eq.s32.totalorder %v525, 3
        %v527 = vsel %vm526, 1, 0
        %v528 = vperm.slane %v527, 0
        %vm529 = vcmp.eq.s32.totalorder %v528, 1
        %v530 = vld [vmem:[%s4] sm:$0xff]
        %v531 = vld [vmem:[%s4 + $0x8] sm:$0xff]
        %v532 = vld [vmem:[%s4 + $0x10] sm:$0xff]
        %v533 = vld [vmem:[%s4 + $0x18] sm:$0xff]
        %v534 = vld [vmem:[%s6] sm:$0xff]
        %v535 = vld [vmem:[%s6 + $0x8] sm:$0xff]
        %v536 = vld [vmem:[%s6 + $0x10] sm:$0xff]
        %v537 = vld [vmem:[%s6 + $0x18] sm:$0xff]
        %v538 = vld [vmem:[%s8] sm:$0x7]
        %v539 = vld [vmem:[%s5] sm:$0xff]
        %v540 = vld [vmem:[%s5 + $0x8] sm:$0xff]
        %v541 = vld [vmem:[%s5 + $0x10] sm:$0xff]
        %v542 = vld [vmem:[%s5 + $0x18] sm:$0xff]
        %544 = vset.pattern.permute.xlu0 0
        %545 = vperm.xlu0 %544, %v539
        %v546 = vpop.permute.xlu0 %545
        %549 = vset.pattern.permute.xlu0 0
        %550 = vperm.xlu0 %549, %v540
        %v551 = vpop.permute.xlu0 %550
        %554 = vset.pattern.permute.xlu0 0
        %555 = vperm.xlu0 %554, %v541
        %v556 = vpop.permute.xlu0 %555
        %559 = vset.pattern.permute.xlu0 0
        %560 = vperm.xlu0 %559, %v542
        %v561 = vpop.permute.xlu0 %560
        %v563 = vld [vmem:[%s7] sm:$0xff]
        %v564 = vld [vmem:[%s7 + $0x8] sm:$0xff]
        %v565 = vld [vmem:[%s7 + $0x10] sm:$0xff]
        %v566 = vld [vmem:[%s7 + $0x18] sm:$0xff]
        %568 = vset.pattern.permute.xlu0 0
        %569 = vperm.xlu0 %568, %v563
        %v570 = vpop.permute.xlu0 %569
        %573 = vset.pattern.permute.xlu0 0
        %574 = vperm.xlu0 %573, %v564
        %v575 = vpop.permute.xlu0 %574
        %578 = vset.pattern.permute.xlu0 0
        %579 = vperm.xlu0 %578, %v565
        %v580 = vpop.permute.xlu0 %579
        %583 = vset.pattern.permute.xlu0 0
        %584 = vperm.xlu0 %583, %v566
        %v585 = vpop.permute.xlu0 %584
        %v587 = vld [vmem:[%s9] sm:$0x7]
        %589 = vset.pattern.permute.xlu0 0
        %590 = vperm.xlu0 %589, %v587
        %v591 = vpop.permute.xlu0 %590
        %vm593 = vcmask 146432
        %v595 = vsel %vm593, %v530, 0
        %v598 = vsel %vm593, %v531, 0
        %v601 = vsel %vm593, %v532, 0
        %v604 = vsel %vm593, %v533, 0
        %vm606 = vcmask 1041408
        %v608 = vsel %vm606, %v522, 0
        %610 = vmatpush.msra.mxu0 0.0
        %611 = vmatpush.msra.mxu0 0.0
        %612 = vmatpush.msra.mxu0 0.0
        %613 = vmatpush.msra.mxu0 0.0
        %614 = vmatpush.msra.mxu0 0.0
        %615 = vmatpush.msra.mxu0 0.0
        %616 = vmatpush.msra.mxu0 0.0
        %617 = vmatpush.msra.mxu0 0.0
        %618 = vmatpush.msra.mxu0 0.0
        %619 = vmatpush.msra.mxu0 0.0
        %620 = vmatpush.msra.mxu0 0.0
        %621 = vmatpush.msra.mxu0 0.0
        %622 = vmatpush.msra.mxu0 0.0
        %623 = vmatpush.msra.mxu0 %v608
        %624 = vmatpush.msra.mxu0 %v521
        %625 = vmatpush.msra.mxu0 %v520
        %626 = vmatmul.f32.gmra.mxu0 %v595
        %v627 = vpop.f32.mrf.mxu0
        %v628 = vadd.f32 %v546, %v627
        %629 = vmatmul.f32.gmra.mxu0 %v598
        %v630 = vpop.f32.mrf.mxu0
        %v631 = vadd.f32 %v551, %v630
        %632 = vmatmul.f32.gmra.mxu0 %v601
        %v633 = vpop.f32.mrf.mxu0
        %v634 = vadd.f32 %v556, %v633
        %635 = vmatmul.f32.gmra.mxu0 %v604
        %v636 = vpop.f32.mrf.mxu0
        %v637 = vadd.f32 %v561, %v636
        %638 = vdwg.mxu0
        %v639 = vmax.f32 %v628, 0.0
        %v640 = vmax.f32 %v631, 0.0
        %v641 = vmax.f32 %v634, 0.0
        %v642 = vmax.f32 %v637, 0.0
        %vm643 = vcmask 261120
        %v645 = vsel %vm643, %v534, 0
        %v648 = vsel %vm643, %v535, 0
        %v651 = vsel %vm643, %v536, 0
        %v654 = vsel %vm643, %v537, 0
        %656 = vmatpush.msra.mxu0 0.0
        %657 = vmatpush.msra.mxu0 0.0
        %658 = vmatpush.msra.mxu0 0.0
        %659 = vmatpush.msra.mxu0 0.0
        %660 = vmatpush.msra.mxu0 0.0
        %661 = vmatpush.msra.mxu0 0.0
        %662 = vmatpush.msra.mxu0 0.0
        %663 = vmatpush.msra.mxu0 0.0
        %664 = vmatpush.msra.mxu0 0.0
        %665 = vmatpush.msra.mxu0 0.0
        %666 = vmatpush.msra.mxu0 0.0
        %667 = vmatpush.msra.mxu0 0.0
        %668 = vmatpush.msra.mxu0 %v642
        %669 = vmatpush.msra.mxu0 %v641
        %670 = vmatpush.msra.mxu0 %v640
        %671 = vmatpush.msra.mxu0 %v639
        %672 = vmatmul.f32.gmra.mxu0 %v645
        %v673 = vpop.f32.mrf.mxu0
        %v674 = vadd.f32 %v570, %v673
        %675 = vmatmul.f32.gmra.mxu0 %v648
        %v676 = vpop.f32.mrf.mxu0
        %v677 = vadd.f32 %v575, %v676
        %678 = vmatmul.f32.gmra.mxu0 %v651
        %v679 = vpop.f32.mrf.mxu0
        %v680 = vadd.f32 %v580, %v679
        %681 = vmatmul.f32.gmra.mxu0 %v654
        %v682 = vpop.f32.mrf.mxu0
        %v683 = vadd.f32 %v585, %v682
        %684 = vdwg.mxu0
        %v685 = vmax.f32 %v674, 0.0
        %v686 = vmax.f32 %v677, 0.0
        %v687 = vmax.f32 %v680, 0.0
        %v688 = vmax.f32 %v683, 0.0
        %v690 = vsel %vm643, %v538, 0
        %692 = vmatpush.msra.mxu0 0.0
        %693 = vmatpush.msra.mxu0 0.0
        %694 = vmatpush.msra.mxu0 0.0
        %695 = vmatpush.msra.mxu0 0.0
        %696 = vmatpush.msra.mxu0 0.0
        %697 = vmatpush.msra.mxu0 0.0
        %698 = vmatpush.msra.mxu0 0.0
        %699 = vmatpush.msra.mxu0 0.0
        %700 = vmatpush.msra.mxu0 0.0
        %701 = vmatpush.msra.mxu0 0.0
        %702 = vmatpush.msra.mxu0 0.0
        %703 = vmatpush.msra.mxu0 0.0
        %704 = vmatpush.msra.mxu0 %v688
        %705 = vmatpush.msra.mxu0 %v687
        %706 = vmatpush.msra.mxu0 %v686
        %707 = vmatpush.msra.mxu0 %v685
        %708 = vmatmul.f32.gmra.mxu0 %v690
        %v709 = vpop.f32.mrf.mxu0
        %v710 = vadd.f32 %v591, %v709
        %711 = vdwg.mxu0
        %v713 = vrot.slane %v521, 5
        %v715 = vsub.f32 %v521, %v713
        %v716 = vsub.f32 %v522, %v713
        %v717 = vadd.f32 %v521, %v715
        %v718 = vadd.f32 %v522, %v716
        %v720 = vrot.slane %v710, 1
        %v722 = vadd.f32 %v717, %v720
        %v723 = vadd.f32 %v718, %v720
        %vm726 = vcmask 1040384
        %v727 = vrot.slane %v722, 7
        %v728 = vrot.slane %v723, 7
        %v729 = vsel %vm726, %v727, %v728
        %v731 = vsel %vm529, %v523, %v729
        %vm733 = vcmask 1044480
        %v734 = vrot.slane %v520, 3
        %v735 = vrot.slane %v521, 3
        %v736 = vsel %vm733, %v734, %v735
        %v737 = vrot.slane %v522, 3
        %v738 = vsel %vm733, %v735, %v737
        %v742 = vrot.slane %v731, 1
        %vm744 = vcmask 1046528
        %v745 = vsel %vm744, %v738, %v742
        %v746 = vsel %vm606, %v742, 0
        %748 = vmatpush.msra.mxu0 0.0
        %749 = vmatpush.msra.mxu0 0.0
        %750 = vmatpush.msra.mxu0 0.0
        %751 = vmatpush.msra.mxu0 0.0
        %752 = vmatpush.msra.mxu0 0.0
        %753 = vmatpush.msra.mxu0 0.0
        %754 = vmatpush.msra.mxu0 0.0
        %755 = vmatpush.msra.mxu0 0.0
        %756 = vmatpush.msra.mxu0 0.0
        %757 = vmatpush.msra.mxu0 0.0
        %758 = vmatpush.msra.mxu0 0.0
        %759 = vmatpush.msra.mxu0 0.0
        %760 = vmatpush.msra.mxu0 0.0
        %761 = vmatpush.msra.mxu0 %v746
        %762 = vmatpush.msra.mxu0 %v745
        %763 = vmatpush.msra.mxu0 %v736
        %764 = vmatmul.f32.gmra.mxu0 %v595
        %v765 = vpop.f32.mrf.mxu0
        %v766 = vadd.f32 %v546, %v765
        %767 = vmatmul.f32.gmra.mxu0 %v598
        %v768 = vpop.f32.mrf.mxu0
        %v769 = vadd.f32 %v551, %v768
        %770 = vmatmul.f32.gmra.mxu0 %v601
        %v771 = vpop.f32.mrf.mxu0
        %v772 = vadd.f32 %v556, %v771
        %773 = vmatmul.f32.gmra.mxu0 %v604
        %v774 = vpop.f32.mrf.mxu0
        %v775 = vadd.f32 %v561, %v774
        %776 = vdwg.mxu0
        %v777 = vmax.f32 %v766, 0.0
        %v778 = vmax.f32 %v769, 0.0
        %v779 = vmax.f32 %v772, 0.0
        %v780 = vmax.f32 %v775, 0.0
        %781 = vmatpush.msra.mxu0 0.0
        %782 = vmatpush.msra.mxu0 0.0
        %783 = vmatpush.msra.mxu0 0.0
        %784 = vmatpush.msra.mxu0 0.0
        %785 = vmatpush.msra.mxu0 0.0
        %786 = vmatpush.msra.mxu0 0.0
        %787 = vmatpush.msra.mxu0 0.0
        %788 = vmatpush.msra.mxu0 0.0
        %789 = vmatpush.msra.mxu0 0.0
        %790 = vmatpush.msra.mxu0 0.0
        %791 = vmatpush.msra.mxu0 0.0
        %792 = vmatpush.msra.mxu0 0.0
        %793 = vmatpush.msra.mxu0 %v780
        %794 = vmatpush.msra.mxu0 %v779
        %795 = vmatpush.msra.mxu0 %v778
        %796 = vmatpush.msra.mxu0 %v777
        %797 = vmatmul.f32.gmra.mxu0 %v645
        %v798 = vpop.f32.mrf.mxu0
        %v799 = vadd.f32 %v570, %v798
        %800 = vmatmul.f32.gmra.mxu0 %v648
        %v801 = vpop.f32.mrf.mxu0
        %v802 = vadd.f32 %v575, %v801
        %803 = vmatmul.f32.gmra.mxu0 %v651
        %v804 = vpop.f32.mrf.mxu0
        %v805 = vadd.f32 %v580, %v804
        %806 = vmatmul.f32.gmra.mxu0 %v654
        %v807 = vpop.f32.mrf.mxu0
        %v808 = vadd.f32 %v585, %v807
        %809 = vdwg.mxu0
        %v810 = vmax.f32 %v799, 0.0
        %v811 = vmax.f32 %v802, 0.0
        %v812 = vmax.f32 %v805, 0.0
        %v813 = vmax.f32 %v808, 0.0
        %814 = vmatpush.msra.mxu0 0.0
        %815 = vmatpush.msra.mxu0 0.0
        %816 = vmatpush.msra.mxu0 0.0
        %817 = vmatpush.msra.mxu0 0.0
        %818 = vmatpush.msra.mxu0 0.0
        %819 = vmatpush.msra.mxu0 0.0
        %820 = vmatpush.msra.mxu0 0.0
        %821 = vmatpush.msra.mxu0 0.0
        %822 = vmatpush.msra.mxu0 0.0
        %823 = vmatpush.msra.mxu0 0.0
        %824 = vmatpush.msra.mxu0 0.0
        %825 = vmatpush.msra.mxu0 0.0
        %826 = vmatpush.msra.mxu0 %v813
        %827 = vmatpush.msra.mxu0 %v812
        %828 = vmatpush.msra.mxu0 %v811
        %829 = vmatpush.msra.mxu0 %v810
        %830 = vmatmul.f32.gmra.mxu0 %v690
        %v831 = vpop.f32.mrf.mxu0
        %v832 = vadd.f32 %v591, %v831
        %833 = vdwg.mxu0
        %v835 = vrot.slane %v745, 5
        %v837 = vsub.f32 %v745, %v835
        %v838 = vsub.f32 %v742, %v835
        %v839 = vadd.f32 %v745, %v837
        %v840 = vadd.f32 %v742, %v838
        %v842 = vrot.slane %v832, 1
        %v844 = vadd.f32 %v839, %v842
        %v845 = vadd.f32 %v840, %v842
        %vm848 = vcmask 1043456
        %v849 = vrot.slane %v844, 4
        %v850 = vrot.slane %v845, 4
        %v851 = vsel %vm848, %v849, %v850
        %v853 = vsel %vm529, %v523, %v851
        %v854 = vrot.slane %v736, 3
        %v855 = vrot.slane %v745, 3
        %v856 = vsel %vm733, %v854, %v855
        %v857 = vrot.slane %v742, 3
        %v858 = vsel %vm733, %v855, %v857
        %v862 = vrot.slane %v853, 4
        %v864 = vsel %vm744, %v858, %v862
        %v865 = vsel %vm606, %v862, 0
        %867 = vmatpush.msra.mxu0 0.0
        %868 = vmatpush.msra.mxu0 0.0
        %869 = vmatpush.msra.mxu0 0.0
        %870 = vmatpush.msra.mxu0 0.0
        %871 = vmatpush.msra.mxu0 0.0
        %872 = vmatpush.msra.mxu0 0.0
        %873 = vmatpush.msra.mxu0 0.0
        %874 = vmatpush.msra.mxu0 0.0
        %875 = vmatpush.msra.mxu0 0.0
        %876 = vmatpush.msra.mxu0 0.0
        %877 = vmatpush.msra.mxu0 0.0
        %878 = vmatpush.msra.mxu0 0.0
        %879 = vmatpush.msra.mxu0 0.0
        %880 = vmatpush.msra.mxu0 %v865
        %881 = vmatpush.msra.mxu0 %v864
        %882 = vmatpush.msra.mxu0 %v856
        %883 = vmatmul.f32.gmra.mxu0 %v595
        %v884 = vpop.f32.mrf.mxu0
        %v885 = vadd.f32 %v546, %v884
        %886 = vmatmul.f32.gmra.mxu0 %v598
        %v887 = vpop.f32.mrf.mxu0
        %v888 = vadd.f32 %v551, %v887
        %889 = vmatmul.f32.gmra.mxu0 %v601
        %v890 = vpop.f32.mrf.mxu0
        %v891 = vadd.f32 %v556, %v890
        %892 = vmatmul.f32.gmra.mxu0 %v604
        %v893 = vpop.f32.mrf.mxu0
        %v894 = vadd.f32 %v561, %v893
        %895 = vdwg.mxu0
        %v896 = vmax.f32 %v885, 0.0
        %v897 = vmax.f32 %v888, 0.0
        %v898 = vmax.f32 %v891, 0.0
        %v899 = vmax.f32 %v894, 0.0
        %900 = vmatpush.msra.mxu0 0.0
        %901 = vmatpush.msra.mxu0 0.0
        %902 = vmatpush.msra.mxu0 0.0
        %903 = vmatpush.msra.mxu0 0.0
        %904 = vmatpush.msra.mxu0 0.0
        %905 = vmatpush.msra.mxu0 0.0
        %906 = vmatpush.msra.mxu0 0.0
        %907 = vmatpush.msra.mxu0 0.0
        %908 = vmatpush.msra.mxu0 0.0
        %909 = vmatpush.msra.mxu0 0.0
        %910 = vmatpush.msra.mxu0 0.0
        %911 = vmatpush.msra.mxu0 0.0
        %912 = vmatpush.msra.mxu0 %v899
        %913 = vmatpush.msra.mxu0 %v898
        %914 = vmatpush.msra.mxu0 %v897
        %915 = vmatpush.msra.mxu0 %v896
        %916 = vmatmul.f32.gmra.mxu0 %v645
        %v917 = vpop.f32.mrf.mxu0
        %v918 = vadd.f32 %v570, %v917
        %919 = vmatmul.f32.gmra.mxu0 %v648
        %v920 = vpop.f32.mrf.mxu0
        %v921 = vadd.f32 %v575, %v920
        %922 = vmatmul.f32.gmra.mxu0 %v651
        %v923 = vpop.f32.mrf.mxu0
        %v924 = vadd.f32 %v580, %v923
        %925 = vmatmul.f32.gmra.mxu0 %v654
        %v926 = vpop.f32.mrf.mxu0
        %v927 = vadd.f32 %v585, %v926
        %928 = vdwg.mxu0
        %v929 = vmax.f32 %v918, 0.0
        %v930 = vmax.f32 %v921, 0.0
        %v931 = vmax.f32 %v924, 0.0
        %v932 = vmax.f32 %v927, 0.0
        %933 = vmatpush.msra.mxu0 0.0
        %934 = vmatpush.msra.mxu0 0.0
        %935 = vmatpush.msra.mxu0 0.0
        %936 = vmatpush.msra.mxu0 0.0
        %937 = vmatpush.msra.mxu0 0.0
        %938 = vmatpush.msra.mxu0 0.0
        %939 = vmatpush.msra.mxu0 0.0
        %940 = vmatpush.msra.mxu0 0.0
        %941 = vmatpush.msra.mxu0 0.0
        %942 = vmatpush.msra.mxu0 0.0
        %943 = vmatpush.msra.mxu0 0.0
        %944 = vmatpush.msra.mxu0 0.0
        %945 = vmatpush.msra.mxu0 %v932
        %946 = vmatpush.msra.mxu0 %v931
        %947 = vmatpush.msra.mxu0 %v930
        %948 = vmatpush.msra.mxu0 %v929
        %949 = vmatmul.f32.gmra.mxu0 %v690
        %v950 = vpop.f32.mrf.mxu0
        %v951 = vadd.f32 %v591, %v950
        %952 = vdwg.mxu0
        %v954 = vrot.slane %v864, 5
        %v956 = vsub.f32 %v864, %v954
        %v957 = vsub.f32 %v862, %v954
        %v958 = vadd.f32 %v864, %v956
        %v959 = vadd.f32 %v862, %v957
        %v961 = vrot.slane %v951, 1
        %v963 = vadd.f32 %v958, %v961
        %v964 = vadd.f32 %v959, %v961
        %v967 = vrot.slane %v963, 1
        %v968 = vrot.slane %v964, 1
        %v969 = vsel %vm744, %v967, %v968
        %v972 = vsel %vm529, %v523, %v969
        %v973 = vsel %vm529, %v524, %v968
        %v974 = vrot.slane %v856, 3
        %v975 = vrot.slane %v864, 3
        %v976 = vsel %vm733, %v974, %v975
        %v977 = vrot.slane %v862, 3
        %v978 = vsel %vm733, %v975, %v977
        %v983 = vrot.slane %v972, 7
        %v984 = vrot.slane %v973, 7
        %v985 = vsel %vm726, %v983, %v984
        %v988 = vsel %vm744, %v978, %v983
        %v989 = vsel %vm606, %v985, 0
        %991 = vmatpush.msra.mxu0 0.0
        %992 = vmatpush.msra.mxu0 0.0
        %993 = vmatpush.msra.mxu0 0.0
        %994 = vmatpush.msra.mxu0 0.0
        %995 = vmatpush.msra.mxu0 0.0
        %996 = vmatpush.msra.mxu0 0.0
        %997 = vmatpush.msra.mxu0 0.0
        %998 = vmatpush.msra.mxu0 0.0
        %999 = vmatpush.msra.mxu0 0.0
        %1000 = vmatpush.msra.mxu0 0.0
        %1001 = vmatpush.msra.mxu0 0.0
        %1002 = vmatpush.msra.mxu0 0.0
        %1003 = vmatpush.msra.mxu0 0.0
        %1004 = vmatpush.msra.mxu0 %v989
        %1005 = vmatpush.msra.mxu0 %v988
        %1006 = vmatpush.msra.mxu0 %v976
        %1007 = vmatmul.f32.gmra.mxu0 %v595
        %v1008 = vpop.f32.mrf.mxu0
        %v1009 = vadd.f32 %v546, %v1008
        %1010 = vmatmul.f32.gmra.mxu0 %v598
        %v1011 = vpop.f32.mrf.mxu0
        %v1012 = vadd.f32 %v551, %v1011
        %1013 = vmatmul.f32.gmra.mxu0 %v601
        %v1014 = vpop.f32.mrf.mxu0
        %v1015 = vadd.f32 %v556, %v1014
        %1016 = vmatmul.f32.gmra.mxu0 %v604
        %v1017 = vpop.f32.mrf.mxu0
        %v1018 = vadd.f32 %v561, %v1017
        %1019 = vdwg.mxu0
        %v1020 = vmax.f32 %v1009, 0.0
        %v1021 = vmax.f32 %v1012, 0.0
        %v1022 = vmax.f32 %v1015, 0.0
        %v1023 = vmax.f32 %v1018, 0.0
        %1024 = vmatpush.msra.mxu0 0.0
        %1025 = vmatpush.msra.mxu0 0.0
        %1026 = vmatpush.msra.mxu0 0.0
        %1027 = vmatpush.msra.mxu0 0.0
        %1028 = vmatpush.msra.mxu0 0.0
        %1029 = vmatpush.msra.mxu0 0.0
        %1030 = vmatpush.msra.mxu0 0.0
        %1031 = vmatpush.msra.mxu0 0.0
        %1032 = vmatpush.msra.mxu0 0.0
        %1033 = vmatpush.msra.mxu0 0.0
        %1034 = vmatpush.msra.mxu0 0.0
        %1035 = vmatpush.msra.mxu0 0.0
        %1036 = vmatpush.msra.mxu0 %v1023
        %1037 = vmatpush.msra.mxu0 %v1022
        %1038 = vmatpush.msra.mxu0 %v1021
        %1039 = vmatpush.msra.mxu0 %v1020
        %1040 = vmatmul.f32.gmra.mxu0 %v645
        %v1041 = vpop.f32.mrf.mxu0
        %v1042 = vadd.f32 %v570, %v1041
        %1043 = vmatmul.f32.gmra.mxu0 %v648
        %v1044 = vpop.f32.mrf.mxu0
        %v1045 = vadd.f32 %v575, %v1044
        %1046 = vmatmul.f32.gmra.mxu0 %v651
        %v1047 = vpop.f32.mrf.mxu0
        %v1048 = vadd.f32 %v580, %v1047
        %1049 = vmatmul.f32.gmra.mxu0 %v654
        %v1050 = vpop.f32.mrf.mxu0
        %v1051 = vadd.f32 %v585, %v1050
        %1052 = vdwg.mxu0
        %v1053 = vmax.f32 %v1042, 0.0
        %v1054 = vmax.f32 %v1045, 0.0
        %v1055 = vmax.f32 %v1048, 0.0
        %v1056 = vmax.f32 %v1051, 0.0
        %1057 = vmatpush.msra.mxu0 0.0
        %1058 = vmatpush.msra.mxu0 0.0
        %1059 = vmatpush.msra.mxu0 0.0
        %1060 = vmatpush.msra.mxu0 0.0
        %1061 = vmatpush.msra.mxu0 0.0
        %1062 = vmatpush.msra.mxu0 0.0
        %1063 = vmatpush.msra.mxu0 0.0
        %1064 = vmatpush.msra.mxu0 0.0
        %1065 = vmatpush.msra.mxu0 0.0
        %1066 = vmatpush.msra.mxu0 0.0
        %1067 = vmatpush.msra.mxu0 0.0
        %1068 = vmatpush.msra.mxu0 0.0
        %1069 = vmatpush.msra.mxu0 %v1056
        %1070 = vmatpush.msra.mxu0 %v1055
        %1071 = vmatpush.msra.mxu0 %v1054
        %1072 = vmatpush.msra.mxu0 %v1053
        %1073 = vmatmul.f32.gmra.mxu0 %v690
        %v1074 = vpop.f32.mrf.mxu0
        %v1075 = vadd.f32 %v591, %v1074
        %1076 = vdwg.mxu0
        %v1078 = vrot.slane %v988, 5
        %v1080 = vsub.f32 %v988, %v1078
        %v1081 = vsub.f32 %v985, %v1078
        %v1082 = vadd.f32 %v988, %v1080
        %v1083 = vadd.f32 %v985, %v1081
        %v1085 = vrot.slane %v1075, 1
        %v1087 = vadd.f32 %v1082, %v1085
        %v1088 = vadd.f32 %v1083, %v1085
        %v1091 = vrot.slane %v1087, 6
        %v1092 = vrot.slane %v1088, 6
        %v1093 = vsel %vm606, %v1091, %v1092
        %v1095 = vsel %vm529, %v524, %v1093
        %vm1096 = vcmask 1042432
        %v1097 = vsel %vm1096, %v731, %v853
        %vm1098 = vcmask 1045504
        %v1099 = vsel %vm1098, %v1097, %v972
        %v1100 = vsel %vm726, %v973, %v1095
        %1101 = vst [vmem:[%s505] sm:$0xff] %v1099
        %1102 = vst [vmem:[%s505 + $0x8] sm:$0xf] %v1100
        %v1103 = vsub.f32 %v1099, %v523
        %v1104 = vsub.f32 %v1100, %v524
        %v1105 = vld [vmem:[%s516] sm:$0x1]
        %v1107 = vperm.slane %v1105, 0
        %v1109 = vmul.f32 %v1103, %v1107
        %v1110 = vmul.f32 %v1104, %v1107
        %v1111 = vmul.f32 %v1109, %v1109
        %v1112 = vmul.f32 %v1110, %v1110
        %v1113 = vsel %vm848, %v1112, 0.0
        %v1114 = vadd.f32 %v1111, %v1113
        %1115 = vadd.xlane.f32.xlu0 %v1114
        %v1116 = vpop.xlane.xlu0 %1115
        %v1117 = vrot.slane %v1116, 4
        %v1118 = vadd.f32 %v1116, %v1117
        %v1119 = vrot.slane %v1118, 2
        %v1120 = vadd.f32 %v1118, %v1119
        %v1121 = vrot.slane %v1120, 1
        %v1122 = vadd.f32 %v1120, %v1121
        %s1123 = vtos %v1122
        %v1124 = vstv %s1123
        %vm1125 = vcmask 0
        %1126 = vst.msk [vmem:[%s519] sm:$0x1] %vm1125, %v1124
        %s1127 = sand.u32 %s261, 1
        %s1128 = sand.u32 %s261, 1
        %s1129 = smul.addr %s1128, 16
        %s1130 = scalar_lea.vmem [#allocation4], %s1129
        %p1131 = scmp.lt.s32.totalorder %s23, 1
        %s1132 = scalar_select %p1131, %s23, 1
        %s1133 = scalar_lea.vmem %s11, %s1132
        // Predicated region
        $region137: #{_lambda_.1} parent=127 // pred_check
          %p1134 = pneg %p271
        $region138: #{_lambda_.1} parent=127 // pred_check_branch
          %1136 = sbr.rel (%p1134) target = $region140
        $region139: #{_lambda_.1} parent=127 // pred_region
          %s1137 = smul.addr %s23, 8
          %s1138 = scalar_lea.vmem %s10, %s1137
          // Predicated region
          $region141: #{_lambda_.1} parent=139 // pred_check
            _
          $region142: #{_lambda_.1} parent=139 // pred_check_branch
            %1140 = sbr.rel (0) target = $region144
          $region143: #{_lambda_.1} parent=139 // pred_region
            // Predicated region
            $region145: #{_lambda_.1} parent=143 // pred_check
              _
            $region146: #{_lambda_.1} parent=143 // pred_check_branch
              %1142 = sbr.rel (0) target = $region148
            $region147: #{_lambda_.1} parent=143 // pred_region
              // Predicated region
              $region160: #{_lambda_.1} parent=147 // pred_check
                _
              $region161: #{_lambda_.1} parent=147 // pred_check_branch
                %1160 = sbr.rel (0) target = $region163
              $region162: #{_lambda_.1} parent=147 // pred_region
                loop: start=0, step=1, limit=1
                $region164: #{_lambda_.1} parent=162 // loop_pre_header
                  _
                $region165: #{_lambda_.1} parent=162 // loop_header
                  %s1162 = sphi 0, %s1166
                  %p1163 = scmp.ge.s32.totalorder %s1162, 1
                  %s1167 = sphi %s1130, %s1130
                  %s1168 = sphi %s1138, %s1138
                $region166: #{_lambda_.1} parent=162 // loop_header_branch
                  %1165 = sbr.rel (%p1163) target = $region170
                $region167: #{_lambda_.1} parent=162 // loop_body
                  %v1169 = vld [vmem:[%s1167] sm:$0xff]
                  %1170 = vst [vmem:[%s1168] sm:$0xff] %v1169
                  %v1171 = vld [vmem:[%s1167 + $0x8] sm:$0xff]
                  %1172 = vst [vmem:[%s1168 + $0x10] sm:$0xff] %v1171
                $region168: #{_lambda_.1} parent=162 // loop_footer
                  %s1166 = sadd.s32 1, %s1162
                $region169: #{_lambda_.1} parent=162 // loop_footer_branch
                  %1161 = sbr.rel target = $region165
                $region170: #{_lambda_.1} parent=162 // loop_exit
                  _
              $region163: #{_lambda_.1} parent=147 // pred_fallthru
                _
              // Predicated region
              $region171: #{_lambda_.1} parent=147 // pred_check
                _
              $region172: #{_lambda_.1} parent=147 // pred_check_branch
                %1174 = sbr.rel target = $region174
              $region173: #{_lambda_.1} parent=147 // pred_region
                _
              $region174: #{_lambda_.1} parent=147 // pred_fallthru
                _
            $region148: #{_lambda_.1} parent=143 // pred_fallthru
              _
            // Predicated region
            $region149: #{_lambda_.1} parent=143 // pred_check
              _
            $region150: #{_lambda_.1} parent=143 // pred_check_branch
              %1144 = sbr.rel target = $region152
            $region151: #{_lambda_.1} parent=143 // pred_region
              %s1146 = ssub.s32 256, 1
              loop: start=0, step=1, limit=1
              $region153: #{_lambda_.1} parent=151 // loop_pre_header
                _
              $region154: #{_lambda_.1} parent=151 // loop_header
                %s1148 = sphi 0, %s1152
                %p1149 = scmp.ge.s32.totalorder %s1148, 1
                %s1153 = sphi %s1130, %s1130
                %s1154 = sphi %s1138, %s1138
              $region155: #{_lambda_.1} parent=151 // loop_header_branch
                %1151 = sbr.rel (%p1149) target = $region159
              $region156: #{_lambda_.1} parent=151 // loop_body
                %v1155 = vld [vmem:[%s1153] sm:%s1146]
                %1156 = vst [vmem:[%s1154] sm:%s1146] %v1155
                %v1157 = vld [vmem:[%s1153 + $0x8] sm:%s1146]
                %1158 = vst [vmem:[%s1154 + $0x10] sm:%s1146] %v1157
              $region157: #{_lambda_.1} parent=151 // loop_footer
                %s1152 = sadd.s32 1, %s1148
              $region158: #{_lambda_.1} parent=151 // loop_footer_branch
                %1147 = sbr.rel target = $region154
              $region159: #{_lambda_.1} parent=151 // loop_exit
                _
            $region152: #{_lambda_.1} parent=143 // pred_fallthru
              _
          $region144: #{_lambda_.1} parent=139 // pred_fallthru
            _
          %1175 = vnop
        $region140: #{_lambda_.1} parent=127 // pred_fallthru
          _
        // Predicated region
        $region175: #{_lambda_.1} parent=127 // pred_check
          %p1176 = pneg %p297
        $region176: #{_lambda_.1} parent=127 // pred_check_branch
          %1178 = sbr.rel (%p1176) target = $region178
        $region177: #{_lambda_.1} parent=127 // pred_region
          _
        $region178: #{_lambda_.1} parent=127 // pred_fallthru
          _
      $region128: #{_lambda_.1} parent=5 // pred_fallthru
        _
      %p1179 = scmp.le.s32.totalorder 2, %s18
      // Predicated region
      $region179: #{_lambda_.1} parent=5 // pred_check
        %p1180 = pneg %p1179
      $region180: #{_lambda_.1} parent=5 // pred_check_branch
        %1182 = sbr.rel (%p1180) target = $region182
      $region181: #{_lambda_.1} parent=5 // pred_region
        %s1183 = ssub.s32 %s18, 2
        // Predicated region
        $region183: #{_lambda_.1} parent=181 // pred_check
          %p1184 = pneg %p277
        $region184: #{_lambda_.1} parent=181 // pred_check_branch
          %1186 = sbr.rel (%p1184) target = $region186
        $region185: #{_lambda_.1} parent=181 // pred_region
          %s1187 = sand.u32 %s262, 1
          %s1188 = sand.u32 %s262, 1
          %s1189 = smul.addr %s1188, 16
          %s1190 = scalar_lea.vmem [#allocation4], %s1189
        $region186: #{_lambda_.1} parent=181 // pred_fallthru
          _
        // Predicated region
        $region187: #{_lambda_.1} parent=181 // pred_check
          %p1191 = pneg %p303
        $region188: #{_lambda_.1} parent=181 // pred_check_branch
          %1193 = sbr.rel (%p1191) target = $region190
        $region189: #{_lambda_.1} parent=181 // pred_region
          %p1194 = scmp.lt.s32.totalorder %s24, 1
          %s1195 = scalar_select %p1194, %s24, 1
          %s1196 = scalar_lea.vmem %s11, %s1195
        $region190: #{_lambda_.1} parent=181 // pred_fallthru
          _
      $region182: #{_lambda_.1} parent=5 // pred_fallthru
        _
    $region6: #{_lambda_.1} parent=1 // loop_footer
      %s22 = sadd.s32 1, %s18
    $region7: #{_lambda_.1} parent=1 // loop_footer_branch
      %17 = sbr.rel target = $region3
    $region8: #{_lambda_.1} parent=1 // loop_exit
      _

</llo_original>
